<compile_context>
chip_gen: v5e
topology: v5e:2x2
jax: 0.10.0
libtpu: 0.0.40
codegen_flags: <defaults>
</compile_context>

<pallas_src>
import functools

import jax
import jax.numpy as jnp
from jax.experimental import pallas as pl
from jax.experimental.pallas import tpu as pltpu


def _round_up(x, m):
    return (x + m - 1) // m * m


def _fused_kernel(x_ref, wct_ref, bcc_ref, wfc_ref, bfc_ref, o_ref, acc_ref,
                  *, conv_on_vpu, fc_on_vpu, s_extra, inv_s):
    """One grid step = (batch element i, spatial chunk j).

    x_ref  : (1, CK, tS)      bf16  input chunk, channels x spatial (NCS layout)
    wct_ref: (F_pad, CK)      bf16  1x1-conv weight, transposed
    bcc_ref: (F_pad, 1)       f32   conv bias (column)
    wfc_ref: (F_pad, NC_pad)  bf16  Linear weight (in_features x classes)
    bfc_ref: (1, NC_pad)      f32   Linear bias (row)
    o_ref  : (1, 1, NC_pad)   f32   logits for batch element i
    acc_ref: (F_pad, 1)       f32   running spatial sum of relu(conv(x)+bc)
    """
    j = pl.program_id(1)

    @pl.when(j == 0)
    def _():
        acc_ref[...] = jnp.zeros_like(acc_ref)

    f_pad = acc_ref.shape[0]
    ck, t_s = x_ref.shape[1], x_ref.shape[2]

    if conv_on_vpu:
        # Tiny channel count: padding C to the MXU width would inflate the
        # streamed HBM traffic ~32x; a C-unrolled outer-product on the VPU is
        # both cheaper and alignment-free.
        x = x_ref[0].astype(jnp.float32)                        # (CK, tS)
        conv = jnp.zeros((f_pad, t_s), jnp.float32)
        for c in range(ck):
            conv = conv + (wct_ref[:, c:c + 1].astype(jnp.float32)
                           * x[c:c + 1, :])
    else:
        # MXU path: CK is 128/256-aligned by the wrapper.
        conv = jnp.dot(wct_ref[...], x_ref[0],
                       preferred_element_type=jnp.float32)      # (F_pad, tS)

    h = jnp.maximum(conv + bcc_ref[...], 0.0)                   # bias + ReLU (f32)
    acc_ref[...] += jnp.sum(h, axis=1, keepdims=True)           # spatial partial sum

    @pl.when(j == pl.num_programs(1) - 1)
    def _():
        acc = acc_ref[...]
        if s_extra:
            # Zero-padded spatial columns each contributed exactly relu(bc);
            # subtract them once instead of masking on every grid step.
            acc = acc - float(s_extra) * jnp.maximum(bcc_ref[...], 0.0)
        feats = (acc * inv_s).astype(jnp.bfloat16)              # global average pool
        if fc_on_vpu:
            # Small FC: broadcast-multiply-reduce on the VPU keeps the logits
            # lane-dense without any transpose of the (F_pad, 1) features.
            prod = feats.astype(jnp.float32) * wfc_ref[...].astype(jnp.float32)
            logits = jnp.sum(prod, axis=0, keepdims=True)       # (1, NC_pad)
        else:
            logits = jax.lax.dot_general(
                feats, wfc_ref[...],
                dimension_numbers=(((0,), (0,)), ((), ())),
                preferred_element_type=jnp.float32)             # (1, NC_pad)
        logits = logits + bfc_ref[...]
        o_ref[...] = logits.reshape(o_ref.shape).astype(o_ref.dtype)


def classifier_forward(x_nchw, params, *, single_buffer_weights=True):
    """Full forward pass.  x_nchw: (N, C, H, W) float32."""
    wc, bc, wfc_t, bfc = params
    N, C, H, W = x_nchw.shape
    S = H * W
    F = wc.shape[1]
    NC = wfc_t.shape[1]

    # ---- generation-aware VMEM budget --------------------------------------
    try:
        vmem_cap = int(getattr(pltpu.get_tpu_info(), "vmem_capacity_bytes", 0))
    except Exception:
        vmem_cap = 0
    if vmem_cap <= 0:
        vmem_cap = 64 * 2**20                       # conservative (v7x-sized) default
    big_vmem = vmem_cap >= 100 * 2**20              # v5e / v6e: 128 MiB physical

    # ---- padded / tiled sizes ----------------------------------------------
    conv_on_vpu = C <= 32          # keep x's channel dim UNPADDED in HBM for tiny C

    def _mxu_align(d):             # 256-align large dims for the v6e/v7x 256x256 MXU
        return _round_up(d, 256 if d >= 256 else 128)

    CK = C if conv_on_vpu else _mxu_align(C)
    F_pad = _mxu_align(F)
    NC_pad = _round_up(NC, 128)
    fc_on_vpu = (F_pad * NC_pad) <= (1 << 19)       # small head -> VPU, else MXU

    # Spatial (reduction) tile: as large as the per-step VMEM budget allows.
    # Budget includes the double-buffered x tile AND the f32 conv intermediate.
    step_budget = (24 if big_vmem else 10) * 2**20
    bytes_per_s = 8 * (CK + F_pad)
    tS_cap = max(128, (step_budget // bytes_per_s) // 128 * 128)
    tS = min(_round_up(S, 128), tS_cap)
    S_pad = _round_up(S, tS)
    s_extra = S_pad - S

    # ---- operand prep (reshape only: no NCHW->NHWC transpose pre-pass) -----
    # TODO(synk): with CompilerParams(allow_input_fusion=...) the cast/pad
    # could fuse into the pallas_call operand and skip this pre-pass entirely.
    x = x_nchw.reshape(N, C, S).astype(jnp.bfloat16)
    if s_extra or CK != C:
        x = jnp.pad(x, ((0, 0), (0, CK - C), (0, s_extra)))
    wct = jnp.pad(wc.T.astype(jnp.bfloat16), ((0, F_pad - F), (0, CK - C)))
    bcc = jnp.pad(bc.reshape(F, 1).astype(jnp.float32), ((0, F_pad - F), (0, 0)))
    wfc = jnp.pad(wfc_t.astype(jnp.bfloat16), ((0, F_pad - F), (0, NC_pad - NC)))
    bfc_p = jnp.pad(bfc.astype(jnp.float32), ((0, 0), (0, NC_pad - NC)))

    grid = (N, S_pad // tS)        # (parallel batch, arbitrary spatial reduction)

    def const_spec(shape):         # grid-invariant operand -> single VMEM buffer
        if single_buffer_weights:
            return pl.BlockSpec(shape, lambda i, j: (0,) * len(shape),
                                pipeline_mode=pl.Buffered(1))
        return pl.BlockSpec(shape, lambda i, j: (0,) * len(shape))

    in_specs = [
        pl.BlockSpec((1, CK, tS), lambda i, j: (i, 0, j)),       # x chunk
        const_spec((F_pad, CK)),                                 # conv W^T
        const_spec((F_pad, 1)),                                  # conv bias
        const_spec((F_pad, NC_pad)),                             # fc W
        const_spec((1, NC_pad)),                                 # fc bias
    ]
    out_spec = pl.BlockSpec((1, 1, NC_pad), lambda i, j: (i, 0, 0))

    kernel = functools.partial(
        _fused_kernel, conv_on_vpu=conv_on_vpu, fc_on_vpu=fc_on_vpu,
        s_extra=s_extra, inv_s=1.0 / S)

    # ---- VMEM accounting (now includes the f32 conv intermediate) ----------
    wb = 1 if single_buffer_weights else 2
    vmem_needed = (
        2 * CK * tS * 2                        # x tile, double-buffered bf16
        + 2 * F_pad * tS * 4                   # conv/ReLU f32 intermediate (+temp)
        + CK * tS * 4                          # f32 cast of x (VPU conv path)
        + wb * F_pad * max(CK, 128) * 2        # wct (lane-padded VMEM layout)
        + wb * F_pad * 128 * 4                 # bcc
        + wb * F_pad * NC_pad * 2              # wfc
        + wb * 8 * NC_pad * 4                  # bfc
        + 2 * 8 * NC_pad * 4                   # logits block, double-buffered
        + F_pad * 128 * 4                      # accumulator scratch
        + (F_pad * NC_pad * 4 if fc_on_vpu else 0)   # FC product temp
        + (2 << 20)                            # compiler-internal headroom
    )
    target_cap = (vmem_cap * 3) // 4           # ~96 MiB on v5e/v6e, ~48 MiB on v7x
    vmem_limit = min(target_cap, max(32 * 2**20, 2 * vmem_needed))
    vmem_limit = int(max(vmem_limit,
                         min(vmem_needed + (4 << 20), vmem_cap - (2 << 20))))

    # Advisory cost: real (unpadded) work, not padded work.
    flops = 2 * N * S * C * F + N * S * F + 2 * N * F * NC
    bytes_accessed = (x.size * 2 + wct.size * 2 + bcc.size * 4
                      + wfc.size * 2 + bfc_p.size * 4 + N * NC_pad * 4)

    out = pl.pallas_call(
        kernel,
        out_shape=jax.ShapeDtypeStruct((N, 1, NC_pad), jnp.float32),
        grid=grid,
        in_specs=in_specs,
        out_specs=out_spec,
        scratch_shapes=[pltpu.VMEM((F_pad, 1), jnp.float32)],
        compiler_params=pltpu.CompilerParams(
            dimension_semantics=("parallel", "arbitrary"),
            vmem_limit_bytes=vmem_limit),
        cost_estimate=pl.CostEstimate(
            flops=flops, transcendentals=0, bytes_accessed=bytes_accessed),
    )(x, wct, bcc, wfc, bfc_p)

    return out[:, 0, :NC]


def init_params(key, C, F, num_classes):
    """Deterministic synthetic parameters (no checkpoint loading).

    Matmul weights are stored in bf16 (MXU-friendly, halves HBM traffic);
    biases stay f32 and all accumulation is f32.
    """
    k1, k2, k3, k4 = jax.random.split(key, 4)
    wc = (jax.random.normal(k1, (C, F), jnp.float32) * 0.1).astype(jnp.bfloat16)
    bc = jax.random.normal(k2, (1, F), jnp.float32) * 0.1
    # nn.Linear(F, num_classes): weight (num_classes, F); stored pre-transposed.
    wfc = (jax.random.normal(k3, (num_classes, F), jnp.float32) * 0.1
           ).astype(jnp.bfloat16)
    bfc = jax.random.normal(k4, (1, num_classes), jnp.float32) * 0.1
    return wc, bc, wfc.T, bfc


def reference_forward(x_nchw, params):
    """Pure-JAX reference with the same bf16-in / f32-accumulate numerics."""
    wc, bc, wfc_t, bfc = params
    N, C, H, W = x_nchw.shape
    x = jnp.transpose(x_nchw, (0, 2, 3, 1)).reshape(N, H * W, C)
    x = x.astype(jnp.bfloat16)
    h = jnp.einsum("nsc,cf->nsf", x, wc, preferred_element_type=jnp.float32) + bc
    h = jnp.maximum(h, 0.0)
    f = jnp.mean(h, axis=1)
    logits = jnp.dot(f.astype(jnp.bfloat16), wfc_t,
                     preferred_element_type=jnp.float32) + bfc
    return logits


if __name__ == "__main__":
    # TODO(synk): feat_extractor is an injected module in the original code; a
    # deterministic 1x1-conv + ReLU + global-avg-pool stand-in is used here.
    key = jax.random.PRNGKey(0)
    kx, kp = jax.random.split(key)

    N, C, H, W = 2, 4, 16, 16
    F, num_classes = 32, 10

    x = jax.random.normal(kx, (N, C, H, W), jnp.float32)
    params = init_params(kp, C, F, num_classes)

    try:
        fwd = jax.jit(functools.partial(classifier_forward,
                                        single_buffer_weights=True))
        logits = jax.block_until_ready(fwd(x, params))
    except Exception:
        # pl.Buffered(1) on the resident weights is an optimization only; fall
        # back to default double-buffered weight specs if the installed Pallas
        # version rejects the pipeline_mode request.
        fwd = jax.jit(functools.partial(classifier_forward,
                                        single_buffer_weights=False))
        logits = jax.block_until_ready(fwd(x, params))

    ref = reference_forward(x, params)
    assert logits.shape == (N, num_classes)
    max_err = jnp.max(jnp.abs(logits - ref))
    assert jnp.allclose(logits, ref, atol=1e-2, rtol=1e-2), (
        "max abs diff: %s" % max_err)

    print("KERNEL_OK")
</pallas_src>

<mosaic_0001>
module attributes {stable_mosaic.version = 11 : i64} {
  func.func @_fused_kernel(%arg0: i32, %arg1: i32, %arg2: memref<1x4x256xbf16, #tpu.memory_space<vmem>>, %arg3: memref<128x4xbf16, #tpu.memory_space<vmem>>, %arg4: memref<128x1xf32, #tpu.memory_space<vmem>>, %arg5: memref<128x128xbf16, #tpu.memory_space<vmem>>, %arg6: memref<1x128xf32, #tpu.memory_space<vmem>>, %arg7: memref<1x1x128xf32, #tpu.memory_space<vmem>>, %arg8: memref<128x1xf32, #tpu.memory_space<vmem>>) attributes {dimension_semantics = [#tpu.dimension_semantics<parallel>, #tpu.dimension_semantics<arbitrary>], iteration_bounds = array<i64: 2, 1>, scalar_prefetch = 0 : i64, scratch_operands = 1 : i64, tpu.core_type = #tpu.core_type<tc>, window_params = [{transform_indices = @transform_0, window_bounds = array<i64: 1, 4, 256>}, {pipeline_mode = #tpu.pipeline_mode<synchronous>, transform_indices = @transform_1, window_bounds = array<i64: 128, 4>}, {pipeline_mode = #tpu.pipeline_mode<synchronous>, transform_indices = @transform_2, window_bounds = array<i64: 128, 1>}, {pipeline_mode = #tpu.pipeline_mode<synchronous>, transform_indices = @transform_3, window_bounds = array<i64: 128, 128>}, {pipeline_mode = #tpu.pipeline_mode<synchronous>, transform_indices = @transform_4, window_bounds = array<i64: 1, 128>}, {transform_indices = @transform_5, window_bounds = array<i64: 1, 1, 128>}]} {
    %c0_i32 = arith.constant 0 : i32
    %0 = arith.cmpi eq, %arg1, %c0_i32 : i32
    %1 = arith.extui %0 : i1 to i32
    %c0_i32_0 = arith.constant 0 : i32
    %2 = arith.cmpi ne, %1, %c0_i32_0 : i32
    scf.if %2 {
      %cst_18 = arith.constant 0.000000e+00 : f32
      %48 = vector.broadcast %cst_18 : f32 to vector<128x1xf32>
      %c0_19 = arith.constant 0 : index
      %c0_20 = arith.constant 0 : index
      %49 = vector.load %arg8[%c0_19, %c0_20] : memref<128x1xf32, #tpu.memory_space<vmem>>, vector<128x1xf32>
      tpu.vector_store %arg8[%c0_19, %c0_20], %48 {strides = array<i32>} : memref<128x1xf32, #tpu.memory_space<vmem>>, vector<128x1xf32>,
    } else {
    }
    %c0 = arith.constant 0 : index
    %c0_1 = arith.constant 0 : index
    %c0_2 = arith.constant 0 : index
    %3 = vector.load %arg2[%c0, %c0_1, %c0_2] : memref<1x4x256xbf16, #tpu.memory_space<vmem>>, vector<1x4x256xbf16>
    %4 = vector.shape_cast %3 : vector<1x4x256xbf16> to vector<4x256xbf16>
    %5 = arith.extf %4 : vector<4x256xbf16> to vector<4x256xf32>
    %cst = arith.constant 0.000000e+00 : f32
    %6 = vector.broadcast %cst : f32 to vector<128x256xf32>
    %c0_3 = arith.constant 0 : index
    %c0_4 = arith.constant 0 : index
    %7 = vector.load %arg3[%c0_3, %c0_4] : memref<128x4xbf16, #tpu.memory_space<vmem>>, vector<128x1xbf16>
    %8 = arith.extf %7 : vector<128x1xbf16> to vector<128x1xf32>
    %9 = vector.extract_strided_slice %5 {offsets = [0, 0], sizes = [1, 256], strides = [1, 1]} : vector<4x256xf32> to vector<1x256xf32>
    %10 = vector.broadcast %8 : vector<128x1xf32> to vector<128x256xf32>
    %11 = vector.broadcast %9 : vector<1x256xf32> to vector<128x256xf32>
    %12 = arith.mulf %10, %11 : vector<128x256xf32>
    %13 = arith.addf %6, %12 : vector<128x256xf32>
    %c0_5 = arith.constant 0 : index
    %c1 = arith.constant 1 : index
    %14 = vector.load %arg3[%c0_5, %c1] : memref<128x4xbf16, #tpu.memory_space<vmem>>, vector<128x1xbf16>
    %15 = arith.extf %14 : vector<128x1xbf16> to vector<128x1xf32>
    %16 = vector.extract_strided_slice %5 {offsets = [1, 0], sizes = [1, 256], strides = [1, 1]} : vector<4x256xf32> to vector<1x256xf32>
    %17 = vector.broadcast %15 : vector<128x1xf32> to vector<128x256xf32>
    %18 = vector.broadcast %16 : vector<1x256xf32> to vector<128x256xf32>
    %19 = arith.mulf %17, %18 : vector<128x256xf32>
    %20 = arith.addf %13, %19 : vector<128x256xf32>
    %c0_6 = arith.constant 0 : index
    %c2 = arith.constant 2 : index
    %21 = vector.load %arg3[%c0_6, %c2] : memref<128x4xbf16, #tpu.memory_space<vmem>>, vector<128x1xbf16>
    %22 = arith.extf %21 : vector<128x1xbf16> to vector<128x1xf32>
    %23 = vector.extract_strided_slice %5 {offsets = [2, 0], sizes = [1, 256], strides = [1, 1]} : vector<4x256xf32> to vector<1x256xf32>
    %24 = vector.broadcast %22 : vector<128x1xf32> to vector<128x256xf32>
    %25 = vector.broadcast %23 : vector<1x256xf32> to vector<128x256xf32>
    %26 = arith.mulf %24, %25 : vector<128x256xf32>
    %27 = arith.addf %20, %26 : vector<128x256xf32>
    %c0_7 = arith.constant 0 : index
    %c3 = arith.constant 3 : index
    %28 = vector.load %arg3[%c0_7, %c3] : memref<128x4xbf16, #tpu.memory_space<vmem>>, vector<128x1xbf16>
    %29 = arith.extf %28 : vector<128x1xbf16> to vector<128x1xf32>
    %30 = vector.extract_strided_slice %5 {offsets = [3, 0], sizes = [1, 256], strides = [1, 1]} : vector<4x256xf32> to vector<1x256xf32>
    %31 = vector.broadcast %29 : vector<128x1xf32> to vector<128x256xf32>
    %32 = vector.broadcast %30 : vector<1x256xf32> to vector<128x256xf32>
    %33 = arith.mulf %31, %32 : vector<128x256xf32>
    %34 = arith.addf %27, %33 : vector<128x256xf32>
    %c0_8 = arith.constant 0 : index
    %c0_9 = arith.constant 0 : index
    %35 = vector.load %arg4[%c0_8, %c0_9] : memref<128x1xf32, #tpu.memory_space<vmem>>, vector<128x1xf32>
    %36 = vector.broadcast %35 : vector<128x1xf32> to vector<128x256xf32>
    %37 = arith.addf %34, %36 : vector<128x256xf32>
    %cst_10 = arith.constant 0.000000e+00 : f32
    %38 = vector.broadcast %cst_10 : f32 to vector<128x256xf32>
    %39 = arith.maximumf %37, %38 : vector<128x256xf32>
    %c0_11 = arith.constant 0 : index
    %c0_12 = arith.constant 0 : index
    %40 = vector.load %arg8[%c0_11, %c0_12] : memref<128x1xf32, #tpu.memory_space<vmem>>, vector<128x1xf32>
    %cst_13 = arith.constant dense<0.000000e+00> : vector<128xf32>
    %41 = vector.multi_reduction <add>, %39, %cst_13 [1] : vector<128x256xf32> to vector<128xf32>
    %42 = vector.shape_cast %41 : vector<128xf32> to vector<128x1xf32>
    %43 = arith.addf %40, %42 : vector<128x1xf32>
    %c0_14 = arith.constant 0 : index
    %c0_15 = arith.constant 0 : index
    %44 = vector.load %arg8[%c0_14, %c0_15] : memref<128x1xf32, #tpu.memory_space<vmem>>, vector<128x1xf32>
    tpu.vector_store %arg8[%c0_14, %c0_15], %43 {strides = array<i32>} : memref<128x1xf32, #tpu.memory_space<vmem>>, vector<128x1xf32>,
    %c0_i32_16 = arith.constant 0 : i32
    %45 = arith.cmpi eq, %arg1, %c0_i32_16 : i32
    %46 = arith.extui %45 : i1 to i32
    %c0_i32_17 = arith.constant 0 : i32
    %47 = arith.cmpi ne, %46, %c0_i32_17 : i32
    scf.if %47 {
      %c0_18 = arith.constant 0 : index
      %c0_19 = arith.constant 0 : index
      %48 = vector.load %arg8[%c0_18, %c0_19] : memref<128x1xf32, #tpu.memory_space<vmem>>, vector<128x1xf32>
      %cst_20 = arith.constant 3.906250e-03 : f32
      %49 = vector.broadcast %cst_20 : f32 to vector<128x1xf32>
      %50 = arith.mulf %48, %49 : vector<128x1xf32>
      %51 = arith.truncf %50 : vector<128x1xf32> to vector<128x1xbf16>
      %52 = arith.extf %51 : vector<128x1xbf16> to vector<128x1xf32>
      %c0_21 = arith.constant 0 : index
      %c0_22 = arith.constant 0 : index
      %53 = vector.load %arg5[%c0_21, %c0_22] : memref<128x128xbf16, #tpu.memory_space<vmem>>, vector<128x128xbf16>
      %54 = arith.extf %53 : vector<128x128xbf16> to vector<128x128xf32>
      %55 = vector.broadcast %52 : vector<128x1xf32> to vector<128x128xf32>
      %56 = arith.mulf %55, %54 : vector<128x128xf32>
      %cst_23 = arith.constant dense<0.000000e+00> : vector<128xf32>
      %57 = vector.multi_reduction <add>, %56, %cst_23 [0] : vector<128x128xf32> to vector<128xf32>
      %58 = vector.shape_cast %57 : vector<128xf32> to vector<1x128xf32>
      %c0_24 = arith.constant 0 : index
      %c0_25 = arith.constant 0 : index
      %59 = vector.load %arg6[%c0_24, %c0_25] : memref<1x128xf32, #tpu.memory_space<vmem>>, vector<1x128xf32>
      %60 = arith.addf %58, %59 : vector<1x128xf32>
      %61 = vector.shape_cast %60 : vector<1x128xf32> to vector<1x1x128xf32>
      %c0_26 = arith.constant 0 : index
      %c0_27 = arith.constant 0 : index
      %c0_28 = arith.constant 0 : index
      %62 = vector.load %arg7[%c0_26, %c0_27, %c0_28] : memref<1x1x128xf32, #tpu.memory_space<vmem>>, vector<1x1x128xf32>
      tpu.vector_store %arg7[%c0_26, %c0_27, %c0_28], %61 {strides = array<i32>} : memref<1x1x128xf32, #tpu.memory_space<vmem>>, vector<1x1x128xf32>,
    } else {
    }
    return
  }
  func.func @transform_0(%arg0: i32, %arg1: i32) -> (i32, i32, i32) {
    %c0_i32 = arith.constant 0 : i32
    %c0_i32_0 = arith.constant 0 : i32
    return %arg0, %c0_i32, %arg1 : i32, i32, i32
  }
  func.func @transform_1(%arg0: i32, %arg1: i32) -> (i32, i32) {
    %c0_i32 = arith.constant 0 : i32
    %c0_i32_0 = arith.constant 0 : i32
    %c0_i32_1 = arith.constant 0 : i32
    return %c0_i32, %c0_i32_0 : i32, i32
  }
  func.func @transform_2(%arg0: i32, %arg1: i32) -> (i32, i32) {
    %c0_i32 = arith.constant 0 : i32
    %c0_i32_0 = arith.constant 0 : i32
    %c0_i32_1 = arith.constant 0 : i32
    return %c0_i32, %c0_i32_0 : i32, i32
  }
  func.func @transform_3(%arg0: i32, %arg1: i32) -> (i32, i32) {
    %c0_i32 = arith.constant 0 : i32
    %c0_i32_0 = arith.constant 0 : i32
    %c0_i32_1 = arith.constant 0 : i32
    return %c0_i32, %c0_i32_0 : i32, i32
  }
  func.func @transform_4(%arg0: i32, %arg1: i32) -> (i32, i32) {
    %c0_i32 = arith.constant 0 : i32
    %c0_i32_0 = arith.constant 0 : i32
    %c0_i32_1 = arith.constant 0 : i32
    return %c0_i32, %c0_i32_0 : i32, i32
  }
  func.func @transform_5(%arg0: i32, %arg1: i32) -> (i32, i32, i32) {
    %c0_i32 = arith.constant 0 : i32
    %c0_i32_0 = arith.constant 0 : i32
    %c0_i32_1 = arith.constant 0 : i32
    return %arg0, %c0_i32, %c0_i32_0 : i32, i32, i32
  }
}

module attributes {stable_mosaic.version = 11 : i64} {
  func.func @_fused_kernel(%arg0: i32, %arg1: i32, %arg2: memref<1x4x256xbf16, #tpu.memory_space<vmem>>, %arg3: memref<128x4xbf16, #tpu.memory_space<vmem>>, %arg4: memref<128x1xf32, #tpu.memory_space<vmem>>, %arg5: memref<128x128xbf16, #tpu.memory_space<vmem>>, %arg6: memref<1x128xf32, #tpu.memory_space<vmem>>, %arg7: memref<1x1x128xf32, #tpu.memory_space<vmem>>, %arg8: memref<128x1xf32, #tpu.memory_space<vmem>>) attributes {dimension_semantics = [#tpu.dimension_semantics<parallel>, #tpu.dimension_semantics<arbitrary>], iteration_bounds = array<i64: 2, 1>, scalar_prefetch = 0 : i64, scratch_operands = 1 : i64, tpu.core_type = #tpu.core_type<tc>, window_params = [{transform_indices = @transform_0, window_bounds = array<i64: 1, 4, 256>}, {pipeline_mode = #tpu.pipeline_mode<synchronous>, transform_indices = @transform_1, window_bounds = array<i64: 128, 4>}, {pipeline_mode = #tpu.pipeline_mode<synchronous>, transform_indices = @transform_2, window_bounds = array<i64: 128, 1>}, {pipeline_mode = #tpu.pipeline_mode<synchronous>, transform_indices = @transform_3, window_bounds = array<i64: 128, 128>}, {pipeline_mode = #tpu.pipeline_mode<synchronous>, transform_indices = @transform_4, window_bounds = array<i64: 1, 128>}, {transform_indices = @transform_5, window_bounds = array<i64: 1, 1, 128>}]} {
    %c0_i32 = arith.constant 0 : i32
    %0 = arith.cmpi eq, %arg1, %c0_i32 : i32
    %1 = arith.extui %0 : i1 to i32
    %c0_i32_0 = arith.constant 0 : i32
    %2 = arith.cmpi ne, %1, %c0_i32_0 : i32
    scf.if %2 {
      %cst_18 = arith.constant 0.000000e+00 : f32
      %48 = vector.broadcast %cst_18 : f32 to vector<128x1xf32>
      %c0_19 = arith.constant 0 : index
      %c0_20 = arith.constant 0 : index
      %49 = vector.load %arg8[%c0_19, %c0_20] : memref<128x1xf32, #tpu.memory_space<vmem>>, vector<128x1xf32>
      tpu.vector_store %arg8[%c0_19, %c0_20], %48 {strides = array<i32>} : memref<128x1xf32, #tpu.memory_space<vmem>>, vector<128x1xf32>,
    } else {
    }
    %c0 = arith.constant 0 : index
    %c0_1 = arith.constant 0 : index
    %c0_2 = arith.constant 0 : index
    %3 = vector.load %arg2[%c0, %c0_1, %c0_2] : memref<1x4x256xbf16, #tpu.memory_space<vmem>>, vector<1x4x256xbf16>
    %4 = vector.shape_cast %3 : vector<1x4x256xbf16> to vector<4x256xbf16>
    %5 = arith.extf %4 : vector<4x256xbf16> to vector<4x256xf32>
    %cst = arith.constant 0.000000e+00 : f32
    %6 = vector.broadcast %cst : f32 to vector<128x256xf32>
    %c0_3 = arith.constant 0 : index
    %c0_4 = arith.constant 0 : index
    %7 = vector.load %arg3[%c0_3, %c0_4] : memref<128x4xbf16, #tpu.memory_space<vmem>>, vector<128x1xbf16>
    %8 = arith.extf %7 : vector<128x1xbf16> to vector<128x1xf32>
    %9 = vector.extract_strided_slice %5 {offsets = [0, 0], sizes = [1, 256], strides = [1, 1]} : vector<4x256xf32> to vector<1x256xf32>
    %10 = vector.broadcast %8 : vector<128x1xf32> to vector<128x256xf32>
    %11 = vector.broadcast %9 : vector<1x256xf32> to vector<128x256xf32>
    %12 = arith.mulf %10, %11 : vector<128x256xf32>
    %13 = arith.addf %6, %12 : vector<128x256xf32>
    %c0_5 = arith.constant 0 : index
    %c1 = arith.constant 1 : index
    %14 = vector.load %arg3[%c0_5, %c1] : memref<128x4xbf16, #tpu.memory_space<vmem>>, vector<128x1xbf16>
    %15 = arith.extf %14 : vector<128x1xbf16> to vector<128x1xf32>
    %16 = vector.extract_strided_slice %5 {offsets = [1, 0], sizes = [1, 256], strides = [1, 1]} : vector<4x256xf32> to vector<1x256xf32>
    %17 = vector.broadcast %15 : vector<128x1xf32> to vector<128x256xf32>
    %18 = vector.broadcast %16 : vector<1x256xf32> to vector<128x256xf32>
    %19 = arith.mulf %17, %18 : vector<128x256xf32>
    %20 = arith.addf %13, %19 : vector<128x256xf32>
    %c0_6 = arith.constant 0 : index
    %c2 = arith.constant 2 : index
    %21 = vector.load %arg3[%c0_6, %c2] : memref<128x4xbf16, #tpu.memory_space<vmem>>, vector<128x1xbf16>
    %22 = arith.extf %21 : vector<128x1xbf16> to vector<128x1xf32>
    %23 = vector.extract_strided_slice %5 {offsets = [2, 0], sizes = [1, 256], strides = [1, 1]} : vector<4x256xf32> to vector<1x256xf32>
    %24 = vector.broadcast %22 : vector<128x1xf32> to vector<128x256xf32>
    %25 = vector.broadcast %23 : vector<1x256xf32> to vector<128x256xf32>
    %26 = arith.mulf %24, %25 : vector<128x256xf32>
    %27 = arith.addf %20, %26 : vector<128x256xf32>
    %c0_7 = arith.constant 0 : index
    %c3 = arith.constant 3 : index
    %28 = vector.load %arg3[%c0_7, %c3] : memref<128x4xbf16, #tpu.memory_space<vmem>>, vector<128x1xbf16>
    %29 = arith.extf %28 : vector<128x1xbf16> to vector<128x1xf32>
    %30 = vector.extract_strided_slice %5 {offsets = [3, 0], sizes = [1, 256], strides = [1, 1]} : vector<4x256xf32> to vector<1x256xf32>
    %31 = vector.broadcast %29 : vector<128x1xf32> to vector<128x256xf32>
    %32 = vector.broadcast %30 : vector<1x256xf32> to vector<128x256xf32>
    %33 = arith.mulf %31, %32 : vector<128x256xf32>
    %34 = arith.addf %27, %33 : vector<128x256xf32>
    %c0_8 = arith.constant 0 : index
    %c0_9 = arith.constant 0 : index
    %35 = vector.load %arg4[%c0_8, %c0_9] : memref<128x1xf32, #tpu.memory_space<vmem>>, vector<128x1xf32>
    %36 = vector.broadcast %35 : vector<128x1xf32> to vector<128x256xf32>
    %37 = arith.addf %34, %36 : vector<128x256xf32>
    %cst_10 = arith.constant 0.000000e+00 : f32
    %38 = vector.broadcast %cst_10 : f32 to vector<128x256xf32>
    %39 = arith.maximumf %37, %38 : vector<128x256xf32>
    %c0_11 = arith.constant 0 : index
    %c0_12 = arith.constant 0 : index
    %40 = vector.load %arg8[%c0_11, %c0_12] : memref<128x1xf32, #tpu.memory_space<vmem>>, vector<128x1xf32>
    %cst_13 = arith.constant dense<0.000000e+00> : vector<128xf32>
    %41 = vector.multi_reduction <add>, %39, %cst_13 [1] : vector<128x256xf32> to vector<128xf32>
    %42 = vector.shape_cast %41 : vector<128xf32> to vector<128x1xf32>
    %43 = arith.addf %40, %42 : vector<128x1xf32>
    %c0_14 = arith.constant 0 : index
    %c0_15 = arith.constant 0 : index
    %44 = vector.load %arg8[%c0_14, %c0_15] : memref<128x1xf32, #tpu.memory_space<vmem>>, vector<128x1xf32>
    tpu.vector_store %arg8[%c0_14, %c0_15], %43 {strides = array<i32>} : memref<128x1xf32, #tpu.memory_space<vmem>>, vector<128x1xf32>,
    %c0_i32_16 = arith.constant 0 : i32
    %45 = arith.cmpi eq, %arg1, %c0_i32_16 : i32
    %46 = arith.extui %45 : i1 to i32
    %c0_i32_17 = arith.constant 0 : i32
    %47 = arith.cmpi ne, %46, %c0_i32_17 : i32
    scf.if %47 {
      %c0_18 = arith.constant 0 : index
      %c0_19 = arith.constant 0 : index
      %48 = vector.load %arg8[%c0_18, %c0_19] : memref<128x1xf32, #tpu.memory_space<vmem>>, vector<128x1xf32>
      %cst_20 = arith.constant 3.906250e-03 : f32
      %49 = vector.broadcast %cst_20 : f32 to vector<128x1xf32>
      %50 = arith.mulf %48, %49 : vector<128x1xf32>
      %51 = arith.truncf %50 : vector<128x1xf32> to vector<128x1xbf16>
      %52 = arith.extf %51 : vector<128x1xbf16> to vector<128x1xf32>
      %c0_21 = arith.constant 0 : index
      %c0_22 = arith.constant 0 : index
      %53 = vector.load %arg5[%c0_21, %c0_22] : memref<128x128xbf16, #tpu.memory_space<vmem>>, vector<128x128xbf16>
      %54 = arith.extf %53 : vector<128x128xbf16> to vector<128x128xf32>
      %55 = vector.broadcast %52 : vector<128x1xf32> to vector<128x128xf32>
      %56 = arith.mulf %55, %54 : vector<128x128xf32>
      %cst_23 = arith.constant dense<0.000000e+00> : vector<128xf32>
      %57 = vector.multi_reduction <add>, %56, %cst_23 [0] : vector<128x128xf32> to vector<128xf32>
      %58 = vector.shape_cast %57 : vector<128xf32> to vector<1x128xf32>
      %c0_24 = arith.constant 0 : index
      %c0_25 = arith.constant 0 : index
      %59 = vector.load %arg6[%c0_24, %c0_25] : memref<1x128xf32, #tpu.memory_space<vmem>>, vector<1x128xf32>
      %60 = arith.addf %58, %59 : vector<1x128xf32>
      %61 = vector.shape_cast %60 : vector<1x128xf32> to vector<1x1x128xf32>
      %c0_26 = arith.constant 0 : index
      %c0_27 = arith.constant 0 : index
      %c0_28 = arith.constant 0 : index
      %62 = vector.load %arg7[%c0_26, %c0_27, %c0_28] : memref<1x1x128xf32, #tpu.memory_space<vmem>>, vector<1x1x128xf32>
      tpu.vector_store %arg7[%c0_26, %c0_27, %c0_28], %61 {strides = array<i32>} : memref<1x1x128xf32, #tpu.memory_space<vmem>>, vector<1x1x128xf32>,
    } else {
    }
    return
  }
  func.func @transform_0(%arg0: i32, %arg1: i32) -> (i32, i32, i32) {
    %c0_i32 = arith.constant 0 : i32
    %c0_i32_0 = arith.constant 0 : i32
    return %arg0, %c0_i32, %arg1 : i32, i32, i32
  }
  func.func @transform_1(%arg0: i32, %arg1: i32) -> (i32, i32) {
    %c0_i32 = arith.constant 0 : i32
    %c0_i32_0 = arith.constant 0 : i32
    %c0_i32_1 = arith.constant 0 : i32
    return %c0_i32, %c0_i32_0 : i32, i32
  }
  func.func @transform_2(%arg0: i32, %arg1: i32) -> (i32, i32) {
    %c0_i32 = arith.constant 0 : i32
    %c0_i32_0 = arith.constant 0 : i32
    %c0_i32_1 = arith.constant 0 : i32
    return %c0_i32, %c0_i32_0 : i32, i32
  }
  func.func @transform_3(%arg0: i32, %arg1: i32) -> (i32, i32) {
    %c0_i32 = arith.constant 0 : i32
    %c0_i32_0 = arith.constant 0 : i32
    %c0_i32_1 = arith.constant 0 : i32
    return %c0_i32, %c0_i32_0 : i32, i32
  }
  func.func @transform_4(%arg0: i32, %arg1: i32) -> (i32, i32) {
    %c0_i32 = arith.constant 0 : i32
    %c0_i32_0 = arith.constant 0 : i32
    %c0_i32_1 = arith.constant 0 : i32
    return %c0_i32, %c0_i32_0 : i32, i32
  }
  func.func @transform_5(%arg0: i32, %arg1: i32) -> (i32, i32, i32) {
    %c0_i32 = arith.constant 0 : i32
    %c0_i32_0 = arith.constant 0 : i32
    %c0_i32_1 = arith.constant 0 : i32
    return %arg0, %c0_i32, %c0_i32_0 : i32, i32, i32
  }
}

</mosaic_0001>

<llo_original>
// kernel: classifier_forward.1
$region0: #{classifier_forward.1}
  #allocation0 [shape = 'u32[]', space=smem, size = 0x4, offset = 0x4, fixed_abs, tag = 'smem constant byte address 0x4 - core index']
  #allocation1 [shape = 'u32[72,128]{1,0:T(1,128)}', space=vmem, size = 0x9000, scoped, tag = 'internal scratch']
  #allocation2 [shape = 'f32[128,1]{1,0:T(8,128)}', space=vmem, size = 0x10000, scoped, tag = 'scratch operand']
  %s0 = inlined_call_operand.vmem [shape: bf16[2,4,256], index: 0, kind: input, shape index: {}]
  %s1 = inlined_call_operand.vmem [shape: bf16[128,4], index: 1, kind: input, shape index: {}]
  %s2 = inlined_call_operand.vmem [shape: f32[128,1], index: 2, kind: input, shape index: {}]
  %s3 = inlined_call_operand.vmem [shape: bf16[128,128], index: 3, kind: input, shape index: {}]
  %s4 = inlined_call_operand.vmem [shape: f32[1,128], index: 4, kind: input, shape index: {}]
  %s5 = inlined_call_operand.hbm [shape: f32[2,1,128], index: 5, kind: output, shape index: {}]
  %s6 = sld [smem:[#allocation0]]
  $region61: #{classifier_forward.1} parent=0
    _
  %s8 = ssub.s32 1, %s6
  %s9 = scalar_select 0, %s8, %s6
  $region1: #{classifier_forward.1} parent=0
    #allocation3 [shape = 'u8[1024]{0}', space=vmem, size = 0x400, scoped, tag = 'output window, operand 0']
    #allocation4 [shape = 's32[2]{0}', space=sflag, size = 0x8, scoped, tag = 'scoped memory for classifier_forward.1']
    %10 = vsyncpa [#allocation4], 0
    %s11 = scalar_lea.sflag [#allocation4], 1
    %12 = vsyncpa %s11, 0
    loop: start=0, step=1, limit=4
    $region2: #{classifier_forward.1} parent=1 // loop_pre_header
      _
    $region3: #{classifier_forward.1} parent=1 // loop_header
      %s14 = sphi 0, %s18
      %p15 = scmp.ge.s32.totalorder %s14, 4
      %s21 = sphi 0, %s33
      %s22 = sphi 0, %s29
      %s23 = sphi 0, %s21
      %s24 = sphi 0, %s22
      %s25 = sphi 0, %s23
      %s26 = sphi 0, %s24
      %s38 = sphi 0, %s40
      %s41 = sphi 0, %s38
      %s42 = sphi 0, %s41
      %s58 = sphi 0, %s42
      %s62 = sphi 0, %s62
      %s64 = sphi 0, %s62
      %s65 = sphi 0, %s64
      %s79 = sphi 0, %s65
      %s83 = sphi 0, %s83
      %s85 = sphi 0, %s83
      %s86 = sphi 0, %s85
      %s100 = sphi 0, %s86
      %s104 = sphi 0, %s104
      %s106 = sphi 0, %s104
      %s107 = sphi 0, %s106
      %s121 = sphi 0, %s107
      %s125 = sphi 0, %s125
      %s127 = sphi 0, %s125
      %s128 = sphi 0, %s127
      %s142 = sphi 0, %s128
      %s148 = sphi 0, %s150
      %s151 = sphi 0, %s148
      %s152 = sphi 0, %s151
      %s168 = sphi 0, %s152
    $region4: #{classifier_forward.1} parent=1 // loop_header_branch
      %17 = sbr.rel (%p15) target = $region8
    $region5: #{classifier_forward.1} parent=1 // loop_body
      %s19 = ssub.s32 %s14, 1
      %s20 = ssub.s32 %s14, 2
      %s27 = sadd.s32 1, %s22
      %p28 = scmp.ge.s32.totalorder %s27, 1
      %s29 = scalar_select %p28, 0, %s27
      %s30 = sadd.s32 1, %s21
      %s31 = scalar_select %p28, %s30, %s21
      %p32 = scmp.ge.s32.totalorder %s31, 2
      %s33 = scalar_select %p32, 0, %s31
      %s34 = ssub.s32 %s21, %s33
      %s35 = ssub.s32 %s22, %s29
      %s36 = sor.u32 %s34, %s35
      %p37 = scmp.eq.s32.totalorder %s36, 0
      %s39 = sadd.s32 %s38, 1
      %s40 = scalar_select %p37, %s38, %s39
      %p43 = pneg %p37
      %p44 = scmp.eq.s32.totalorder %s14, 1
      %p45 = por %p43, %p44
      %p46 = scmp.ne.s32.totalorder %s38, %s41
      %p47 = scmp.eq.s32.totalorder %s14, 0
      %p48 = por %p46, %p47
      %p49 = scmp.ne.s32.totalorder %s38, %s41
      %p50 = scmp.eq.s32.totalorder %s19, 1
      %p51 = por %p49, %p50
      %p52 = scmp.ne.s32.totalorder %s41, %s42
      %p53 = scmp.eq.s32.totalorder %s19, 0
      %p54 = por %p52, %p53
      %p55 = scmp.ne.s32.totalorder %s41, %s42
      %p56 = scmp.eq.s32.totalorder %s20, 1
      %p57 = por %p55, %p56
      %p59 = scmp.ne.s32.totalorder %s42, %s58
      %p60 = scmp.eq.s32.totalorder %s20, 0
      %p61 = por %p59, %p60
      %s63 = sadd.s32 %s62, 1
      %p66 = scmp.eq.s32.totalorder %s14, 1
      %p67 = scmp.ne.s32.totalorder %s62, %s64
      %p68 = scmp.eq.s32.totalorder %s14, 0
      %p69 = por %p67, %p68
      %p70 = scmp.ne.s32.totalorder %s62, %s64
      %p71 = scmp.eq.s32.totalorder %s19, 1
      %p72 = por %p70, %p71
      %p73 = scmp.ne.s32.totalorder %s64, %s65
      %p74 = scmp.eq.s32.totalorder %s19, 0
      %p75 = por %p73, %p74
      %p76 = scmp.ne.s32.totalorder %s64, %s65
      %p77 = scmp.eq.s32.totalorder %s20, 1
      %p78 = por %p76, %p77
      %p80 = scmp.ne.s32.totalorder %s65, %s79
      %p81 = scmp.eq.s32.totalorder %s20, 0
      %p82 = por %p80, %p81
      %s84 = sadd.s32 %s83, 1
      %p87 = scmp.eq.s32.totalorder %s14, 1
      %p88 = scmp.ne.s32.totalorder %s83, %s85
      %p89 = scmp.eq.s32.totalorder %s14, 0
      %p90 = por %p88, %p89
      %p91 = scmp.ne.s32.totalorder %s83, %s85
      %p92 = scmp.eq.s32.totalorder %s19, 1
      %p93 = por %p91, %p92
      %p94 = scmp.ne.s32.totalorder %s85, %s86
      %p95 = scmp.eq.s32.totalorder %s19, 0
      %p96 = por %p94, %p95
      %p97 = scmp.ne.s32.totalorder %s85, %s86
      %p98 = scmp.eq.s32.totalorder %s20, 1
      %p99 = por %p97, %p98
      %p101 = scmp.ne.s32.totalorder %s86, %s100
      %p102 = scmp.eq.s32.totalorder %s20, 0
      %p103 = por %p101, %p102
      %s105 = sadd.s32 %s104, 1
      %p108 = scmp.eq.s32.totalorder %s14, 1
      %p109 = scmp.ne.s32.totalorder %s104, %s106
      %p110 = scmp.eq.s32.totalorder %s14, 0
      %p111 = por %p109, %p110
      %p112 = scmp.ne.s32.totalorder %s104, %s106
      %p113 = scmp.eq.s32.totalorder %s19, 1
      %p114 = por %p112, %p113
      %p115 = scmp.ne.s32.totalorder %s106, %s107
      %p116 = scmp.eq.s32.totalorder %s19, 0
      %p117 = por %p115, %p116
      %p118 = scmp.ne.s32.totalorder %s106, %s107
      %p119 = scmp.eq.s32.totalorder %s20, 1
      %p120 = por %p118, %p119
      %p122 = scmp.ne.s32.totalorder %s107, %s121
      %p123 = scmp.eq.s32.totalorder %s20, 0
      %p124 = por %p122, %p123
      %s126 = sadd.s32 %s125, 1
      %p129 = scmp.eq.s32.totalorder %s14, 1
      %p130 = scmp.ne.s32.totalorder %s125, %s127
      %p131 = scmp.eq.s32.totalorder %s14, 0
      %p132 = por %p130, %p131
      %p133 = scmp.ne.s32.totalorder %s125, %s127
      %p134 = scmp.eq.s32.totalorder %s19, 1
      %p135 = por %p133, %p134
      %p136 = scmp.ne.s32.totalorder %s127, %s128
      %p137 = scmp.eq.s32.totalorder %s19, 0
      %p138 = por %p136, %p137
      %p139 = scmp.ne.s32.totalorder %s127, %s128
      %p140 = scmp.eq.s32.totalorder %s20, 1
      %p141 = por %p139, %p140
      %p143 = scmp.ne.s32.totalorder %s128, %s142
      %p144 = scmp.eq.s32.totalorder %s20, 0
      %p145 = por %p143, %p144
      %s146 = ssub.s32 %s21, %s33
      %p147 = scmp.eq.s32.totalorder %s146, 0
      %s149 = sadd.s32 %s148, 1
      %s150 = scalar_select %p147, %s148, %s149
      %p153 = pneg %p147
      %p154 = scmp.eq.s32.totalorder %s14, 1
      %p155 = por %p153, %p154
      %p156 = scmp.ne.s32.totalorder %s148, %s151
      %p157 = scmp.eq.s32.totalorder %s14, 0
      %p158 = por %p156, %p157
      %p159 = scmp.ne.s32.totalorder %s148, %s151
      %p160 = scmp.eq.s32.totalorder %s19, 1
      %p161 = por %p159, %p160
      %p162 = scmp.ne.s32.totalorder %s151, %s152
      %p163 = scmp.eq.s32.totalorder %s19, 0
      %p164 = por %p162, %p163
      %p165 = scmp.ne.s32.totalorder %s151, %s152
      %p166 = scmp.eq.s32.totalorder %s20, 1
      %p167 = por %p165, %p166
      %p169 = scmp.ne.s32.totalorder %s152, %s168
      %p170 = scmp.eq.s32.totalorder %s20, 0
      %p171 = por %p169, %p170
      %p172 = scmp.le.s32.totalorder 1, %s14
      %p173 = scmp.lt.s32.totalorder %s14, 3
      %p174 = pnand %p172, %p173
      %p175 = pneg %p174
      // Predicated region
      $region9: #{classifier_forward.1} parent=5 // pred_check
        _
      $region10: #{classifier_forward.1} parent=5 // pred_check_branch
        %177 = sbr.rel (%p174) target = $region12
      $region11: #{classifier_forward.1} parent=5 // pred_region
        %s178 = ssub.s32 %s14, 1
        // Predicated region
        $region13: #{classifier_forward.1} parent=11 // pred_check
          %p179 = pneg %p75
        $region14: #{classifier_forward.1} parent=11 // pred_check_branch
          %181 = sbr.rel (%p179) target = $region16
        $region15: #{classifier_forward.1} parent=11 // pred_region
          _
        $region16: #{classifier_forward.1} parent=11 // pred_fallthru
          _
        // Predicated region
        $region17: #{classifier_forward.1} parent=11 // pred_check
          %p182 = pneg %p96
        $region18: #{classifier_forward.1} parent=11 // pred_check_branch
          %184 = sbr.rel (%p182) target = $region20
        $region19: #{classifier_forward.1} parent=11 // pred_region
          _
        $region20: #{classifier_forward.1} parent=11 // pred_fallthru
          _
        // Predicated region
        $region21: #{classifier_forward.1} parent=11 // pred_check
          %p185 = pneg %p117
        $region22: #{classifier_forward.1} parent=11 // pred_check_branch
          %187 = sbr.rel (%p185) target = $region24
        $region23: #{classifier_forward.1} parent=11 // pred_region
          _
        $region24: #{classifier_forward.1} parent=11 // pred_fallthru
          _
        // Predicated region
        $region25: #{classifier_forward.1} parent=11 // pred_check
          %p188 = pneg %p138
        $region26: #{classifier_forward.1} parent=11 // pred_check_branch
          %190 = sbr.rel (%p188) target = $region28
        $region27: #{classifier_forward.1} parent=11 // pred_region
          _
        $region28: #{classifier_forward.1} parent=11 // pred_fallthru
          _
      $region12: #{classifier_forward.1} parent=5 // pred_fallthru
        _
      %p191 = scmp.lt.s32.totalorder %s14, 2
      // Predicated region
      $region29: #{classifier_forward.1} parent=5 // pred_check
        %p192 = pneg %p191
      $region30: #{classifier_forward.1} parent=5 // pred_check_branch
        %194 = sbr.rel (%p192) target = $region32
      $region31: #{classifier_forward.1} parent=5 // pred_region
        // Predicated region
        $region33: #{classifier_forward.1} parent=31 // pred_check
          %p195 = pneg %p48
        $region34: #{classifier_forward.1} parent=31 // pred_check_branch
          %197 = sbr.rel (%p195) target = $region36
        $region35: #{classifier_forward.1} parent=31 // pred_region
          %s198 = smul.u32 2, %s22
          %p199 = scmp.lt.s32.totalorder %s21, 1
          %s200 = scalar_select %p199, %s21, 1
          %p201 = scmp.lt.s32.totalorder %s198, 1
          %s202 = scalar_select %p201, %s198, 1
          %s203 = smul.addr %s200, 2
          %s204 = sadd.s32 %s202, %s203
          %s205 = smul.addr %s204, 2
          %s206 = scalar_lea.vmem %s0, %s205
          %s207 = smul.u32 2, %s22
        $region36: #{classifier_forward.1} parent=31 // pred_fallthru
          _
      $region32: #{classifier_forward.1} parent=5 // pred_fallthru
        _
      %p208 = scmp.le.s32.totalorder 1, %s14
      %p209 = scmp.lt.s32.totalorder %s14, 3
      %p210 = pnand %p208, %p209
      %p211 = pneg %p210
      // Predicated region
      $region37: #{classifier_forward.1} parent=5 // pred_check
        _
      $region38: #{classifier_forward.1} parent=5 // pred_check_branch
        %213 = sbr.rel (%p210) target = $region40
      $region39: #{classifier_forward.1} parent=5 // pred_region
        %s214 = ssub.s32 %s14, 1
        %s215 = smul.u32 2, %s24
        %p216 = scmp.lt.s32.totalorder %s23, 1
        %s217 = scalar_select %p216, %s23, 1
        %p218 = scmp.lt.s32.totalorder %s215, 1
        %s219 = scalar_select %p218, %s215, 1
        %s220 = smul.addr %s217, 2
        %s221 = sadd.s32 %s219, %s220
        %s222 = smul.addr %s221, 2
        %s223 = scalar_lea.vmem %s0, %s222
        %p224 = pneg %p54
        %p225 = pneg %p51
        %p226 = pneg %p75
        %p227 = pneg %p72
        %p228 = pneg %p96
        %p229 = pneg %p93
        %p230 = pneg %p117
        %p231 = pneg %p114
        %p232 = pneg %p138
        %p233 = pneg %p135
        %p234 = pneg %p164
        %p235 = pneg %p161
        %s236 = sand.u32 %s151, 1
        %s237 = scalar_lea.sflag [#allocation4], %s236
        %s238 = sand.u32 %s151, 1
        %s239 = scalar_lea.vmem [#allocation3], %s238
        %s240 = smul.u32 2, %s24
        %p241 = scmp.lt.s32.totalorder %s23, 1
        %s242 = scalar_select %p241, %s23, 1
        %p243 = scmp.lt.s32.totalorder %s240, 1
        %s244 = scalar_select %p243, %s240, 1
        %s245 = smul.addr %s242, 2
        %s246 = sadd.s32 %s244, %s245
        %s247 = smul.addr %s246, 2
        %s248 = scalar_lea.vmem %s0, %s247
        %s249 = smul.u32 2, %s24
        %p250 = scmp.eq.s32.totalorder %s24, 0
        // Predicated region
        $region41: #{classifier_forward.1} parent=39 // pred_check
          %p251 = pneg %p250
        $region42: #{classifier_forward.1} parent=39 // pred_check_branch
          %253 = sbr.rel (%p251) target = $region44
        $region43: #{classifier_forward.1} parent=39 // pred_region
          %vm254 = vcmask 7168
          %255 = vst.msk [vmem:[#allocation2] sm:$0xff] %vm254, 0.0
          %256 = vst.msk [vmem:[#allocation2 + $0x8] sm:$0xff] %vm254, 0.0
          %257 = vst.msk [vmem:[#allocation2 + $0x10] sm:$0xff] %vm254, 0.0
          %258 = vst.msk [vmem:[#allocation2 + $0x18] sm:$0xff] %vm254, 0.0
          %259 = vst.msk [vmem:[#allocation2 + $0x20] sm:$0xff] %vm254, 0.0
          %260 = vst.msk [vmem:[#allocation2 + $0x28] sm:$0xff] %vm254, 0.0
          %261 = vst.msk [vmem:[#allocation2 + $0x30] sm:$0xff] %vm254, 0.0
          %262 = vst.msk [vmem:[#allocation2 + $0x38] sm:$0xff] %vm254, 0.0
          %263 = vst.msk [vmem:[#allocation2 + $0x40] sm:$0xff] %vm254, 0.0
          %264 = vst.msk [vmem:[#allocation2 + $0x48] sm:$0xff] %vm254, 0.0
          %265 = vst.msk [vmem:[#allocation2 + $0x50] sm:$0xff] %vm254, 0.0
          %266 = vst.msk [vmem:[#allocation2 + $0x58] sm:$0xff] %vm254, 0.0
          %267 = vst.msk [vmem:[#allocation2 + $0x60] sm:$0xff] %vm254, 0.0
          %268 = vst.msk [vmem:[#allocation2 + $0x68] sm:$0xff] %vm254, 0.0
          %269 = vst.msk [vmem:[#allocation2 + $0x70] sm:$0xff] %vm254, 0.0
          %270 = vst.msk [vmem:[#allocation2 + $0x78] sm:$0xff] %vm254, 0.0
        $region44: #{classifier_forward.1} parent=39 // pred_fallthru
          _
        %v271 = vld [vmem:[%s248] sm:$0xf]
        %v272 = vunpack.c.l.bf16 %v271
        %v273 = vld [vmem:[%s1] sm:$0xf]
        %v274 = vld [vmem:[%s1 + $0x4] sm:$0xf]
        %v275 = vld [vmem:[%s1 + $0x8] sm:$0xf]
        %v276 = vld [vmem:[%s1 + $0xc] sm:$0xf]
        %v277 = vld [vmem:[%s1 + $0x10] sm:$0xf]
        %v278 = vld [vmem:[%s1 + $0x14] sm:$0xf]
        %v279 = vld [vmem:[%s1 + $0x18] sm:$0xf]
        %v280 = vld [vmem:[%s1 + $0x1c] sm:$0xf]
        %v281 = vld [vmem:[%s1 + $0x20] sm:$0xf]
        %v282 = vld [vmem:[%s1 + $0x24] sm:$0xf]
        %v283 = vld [vmem:[%s1 + $0x28] sm:$0xf]
        %v284 = vld [vmem:[%s1 + $0x2c] sm:$0xf]
        %v285 = vld [vmem:[%s1 + $0x30] sm:$0xf]
        %v286 = vld [vmem:[%s1 + $0x34] sm:$0xf]
        %v287 = vld [vmem:[%s1 + $0x38] sm:$0xf]
        %v288 = vld [vmem:[%s1 + $0x3c] sm:$0xf]
        %v289 = vunpack.c.l.bf16 %v273
        %v290 = vunpack.c.l.bf16 %v274
        %v291 = vunpack.c.l.bf16 %v275
        %v292 = vunpack.c.l.bf16 %v276
        %v293 = vunpack.c.l.bf16 %v277
        %v294 = vunpack.c.l.bf16 %v278
        %v295 = vunpack.c.l.bf16 %v279
        %v296 = vunpack.c.l.bf16 %v280
        %v297 = vunpack.c.l.bf16 %v281
        %v298 = vunpack.c.l.bf16 %v282
        %v299 = vunpack.c.l.bf16 %v283
        %v300 = vunpack.c.l.bf16 %v284
        %v301 = vunpack.c.l.bf16 %v285
        %v302 = vunpack.c.l.bf16 %v286
        %v303 = vunpack.c.l.bf16 %v287
        %v304 = vunpack.c.l.bf16 %v288
        %306 = vset.pattern.permute.xlu0 0
        %307 = vperm.xlu0 %306, %v289
        %v308 = vpop.permute.xlu0 %307
        %311 = vset.pattern.permute.xlu0 0
        %312 = vperm.xlu0 %311, %v290
        %v313 = vpop.permute.xlu0 %312
        %316 = vset.pattern.permute.xlu0 0
        %317 = vperm.xlu0 %316, %v291
        %v318 = vpop.permute.xlu0 %317
        %321 = vset.pattern.permute.xlu0 0
        %322 = vperm.xlu0 %321, %v292
        %v323 = vpop.permute.xlu0 %322
        %326 = vset.pattern.permute.xlu0 0
        %327 = vperm.xlu0 %326, %v293
        %v328 = vpop.permute.xlu0 %327
        %331 = vset.pattern.permute.xlu0 0
        %332 = vperm.xlu0 %331, %v294
        %v333 = vpop.permute.xlu0 %332
        %336 = vset.pattern.permute.xlu0 0
        %337 = vperm.xlu0 %336, %v295
        %v338 = vpop.permute.xlu0 %337
        %341 = vset.pattern.permute.xlu0 0
        %342 = vperm.xlu0 %341, %v296
        %v343 = vpop.permute.xlu0 %342
        %346 = vset.pattern.permute.xlu0 0
        %347 = vperm.xlu0 %346, %v297
        %v348 = vpop.permute.xlu0 %347
        %351 = vset.pattern.permute.xlu0 0
        %352 = vperm.xlu0 %351, %v298
        %v353 = vpop.permute.xlu0 %352
        %356 = vset.pattern.permute.xlu0 0
        %357 = vperm.xlu0 %356, %v299
        %v358 = vpop.permute.xlu0 %357
        %361 = vset.pattern.permute.xlu0 0
        %362 = vperm.xlu0 %361, %v300
        %v363 = vpop.permute.xlu0 %362
        %366 = vset.pattern.permute.xlu0 0
        %367 = vperm.xlu0 %366, %v301
        %v368 = vpop.permute.xlu0 %367
        %371 = vset.pattern.permute.xlu0 0
        %372 = vperm.xlu0 %371, %v302
        %v373 = vpop.permute.xlu0 %372
        %376 = vset.pattern.permute.xlu0 0
        %377 = vperm.xlu0 %376, %v303
        %v378 = vpop.permute.xlu0 %377
        %381 = vset.pattern.permute.xlu0 0
        %382 = vperm.xlu0 %381, %v304
        %v383 = vpop.permute.xlu0 %382
        %v386 = vperm.slane %v272, 0
        %v387 = vperm.slane %v272, 4
        %v390 = vperm.slane %v386, 0
        %v391 = vperm.slane %v387, 0
        %v392 = vmul.f32 %v308, %v390
        %v393 = vmul.f32 %v308, %v391
        %v394 = vmul.f32 %v313, %v390
        %v395 = vmul.f32 %v313, %v391
        %v396 = vmul.f32 %v318, %v390
        %v397 = vmul.f32 %v318, %v391
        %v398 = vmul.f32 %v323, %v390
        %v399 = vmul.f32 %v323, %v391
        %v400 = vmul.f32 %v328, %v390
        %v401 = vmul.f32 %v328, %v391
        %v402 = vmul.f32 %v333, %v390
        %v403 = vmul.f32 %v333, %v391
        %v404 = vmul.f32 %v338, %v390
        %v405 = vmul.f32 %v338, %v391
        %v406 = vmul.f32 %v343, %v390
        %v407 = vmul.f32 %v343, %v391
        %v408 = vmul.f32 %v348, %v390
        %v409 = vmul.f32 %v348, %v391
        %v410 = vmul.f32 %v353, %v390
        %v411 = vmul.f32 %v353, %v391
        %v412 = vmul.f32 %v358, %v390
        %v413 = vmul.f32 %v358, %v391
        %v414 = vmul.f32 %v363, %v390
        %v415 = vmul.f32 %v363, %v391
        %v416 = vmul.f32 %v368, %v390
        %v417 = vmul.f32 %v368, %v391
        %v418 = vmul.f32 %v373, %v390
        %v419 = vmul.f32 %v373, %v391
        %v420 = vmul.f32 %v378, %v390
        %v421 = vmul.f32 %v378, %v391
        %v422 = vmul.f32 %v383, %v390
        %v423 = vmul.f32 %v383, %v391
        %v424 = vadd.f32 %v392, 0.0
        %v425 = vadd.f32 %v393, 0.0
        %v426 = vadd.f32 %v394, 0.0
        %v427 = vadd.f32 %v395, 0.0
        %v428 = vadd.f32 %v396, 0.0
        %v429 = vadd.f32 %v397, 0.0
        %v430 = vadd.f32 %v398, 0.0
        %v431 = vadd.f32 %v399, 0.0
        %v432 = vadd.f32 %v400, 0.0
        %v433 = vadd.f32 %v401, 0.0
        %v434 = vadd.f32 %v402, 0.0
        %v435 = vadd.f32 %v403, 0.0
        %v436 = vadd.f32 %v404, 0.0
        %v437 = vadd.f32 %v405, 0.0
        %v438 = vadd.f32 %v406, 0.0
        %v439 = vadd.f32 %v407, 0.0
        %v440 = vadd.f32 %v408, 0.0
        %v441 = vadd.f32 %v409, 0.0
        %v442 = vadd.f32 %v410, 0.0
        %v443 = vadd.f32 %v411, 0.0
        %v444 = vadd.f32 %v412, 0.0
        %v445 = vadd.f32 %v413, 0.0
        %v446 = vadd.f32 %v414, 0.0
        %v447 = vadd.f32 %v415, 0.0
        %v448 = vadd.f32 %v416, 0.0
        %v449 = vadd.f32 %v417, 0.0
        %v450 = vadd.f32 %v418, 0.0
        %v451 = vadd.f32 %v419, 0.0
        %v452 = vadd.f32 %v420, 0.0
        %v453 = vadd.f32 %v421, 0.0
        %v454 = vadd.f32 %v422, 0.0
        %v455 = vadd.f32 %v423, 0.0
        %456 = vset.pattern.permute.xlu0 1
        %457 = vperm.xlu0 %456, %v289
        %v458 = vpop.permute.xlu0 %457
        %460 = vset.pattern.permute.xlu0 1
        %461 = vperm.xlu0 %460, %v290
        %v462 = vpop.permute.xlu0 %461
        %464 = vset.pattern.permute.xlu0 1
        %465 = vperm.xlu0 %464, %v291
        %v466 = vpop.permute.xlu0 %465
        %468 = vset.pattern.permute.xlu0 1
        %469 = vperm.xlu0 %468, %v292
        %v470 = vpop.permute.xlu0 %469
        %472 = vset.pattern.permute.xlu0 1
        %473 = vperm.xlu0 %472, %v293
        %v474 = vpop.permute.xlu0 %473
        %476 = vset.pattern.permute.xlu0 1
        %477 = vperm.xlu0 %476, %v294
        %v478 = vpop.permute.xlu0 %477
        %480 = vset.pattern.permute.xlu0 1
        %481 = vperm.xlu0 %480, %v295
        %v482 = vpop.permute.xlu0 %481
        %484 = vset.pattern.permute.xlu0 1
        %485 = vperm.xlu0 %484, %v296
        %v486 = vpop.permute.xlu0 %485
        %488 = vset.pattern.permute.xlu0 1
        %489 = vperm.xlu0 %488, %v297
        %v490 = vpop.permute.xlu0 %489
        %492 = vset.pattern.permute.xlu0 1
        %493 = vperm.xlu0 %492, %v298
        %v494 = vpop.permute.xlu0 %493
        %496 = vset.pattern.permute.xlu0 1
        %497 = vperm.xlu0 %496, %v299
        %v498 = vpop.permute.xlu0 %497
        %500 = vset.pattern.permute.xlu0 1
        %501 = vperm.xlu0 %500, %v300
        %v502 = vpop.permute.xlu0 %501
        %504 = vset.pattern.permute.xlu0 1
        %505 = vperm.xlu0 %504, %v301
        %v506 = vpop.permute.xlu0 %505
        %508 = vset.pattern.permute.xlu0 1
        %509 = vperm.xlu0 %508, %v302
        %v510 = vpop.permute.xlu0 %509
        %512 = vset.pattern.permute.xlu0 1
        %513 = vperm.xlu0 %512, %v303
        %v514 = vpop.permute.xlu0 %513
        %516 = vset.pattern.permute.xlu0 1
        %517 = vperm.xlu0 %516, %v304
        %v518 = vpop.permute.xlu0 %517
        %v520 = vperm.slane %v272, 1
        %v521 = vperm.slane %v272, 5
        %v524 = vperm.slane %v520, 1
        %v525 = vperm.slane %v521, 1
        %v526 = vmul.f32 %v458, %v524
        %v527 = vmul.f32 %v458, %v525
        %v528 = vmul.f32 %v462, %v524
        %v529 = vmul.f32 %v462, %v525
        %v530 = vmul.f32 %v466, %v524
        %v531 = vmul.f32 %v466, %v525
        %v532 = vmul.f32 %v470, %v524
        %v533 = vmul.f32 %v470, %v525
        %v534 = vmul.f32 %v474, %v524
        %v535 = vmul.f32 %v474, %v525
        %v536 = vmul.f32 %v478, %v524
        %v537 = vmul.f32 %v478, %v525
        %v538 = vmul.f32 %v482, %v524
        %v539 = vmul.f32 %v482, %v525
        %v540 = vmul.f32 %v486, %v524
        %v541 = vmul.f32 %v486, %v525
        %v542 = vmul.f32 %v490, %v524
        %v543 = vmul.f32 %v490, %v525
        %v544 = vmul.f32 %v494, %v524
        %v545 = vmul.f32 %v494, %v525
        %v546 = vmul.f32 %v498, %v524
        %v547 = vmul.f32 %v498, %v525
        %v548 = vmul.f32 %v502, %v524
        %v549 = vmul.f32 %v502, %v525
        %v550 = vmul.f32 %v506, %v524
        %v551 = vmul.f32 %v506, %v525
        %v552 = vmul.f32 %v510, %v524
        %v553 = vmul.f32 %v510, %v525
        %v554 = vmul.f32 %v514, %v524
        %v555 = vmul.f32 %v514, %v525
        %v556 = vmul.f32 %v518, %v524
        %v557 = vmul.f32 %v518, %v525
        %v558 = vadd.f32 %v424, %v526
        %v559 = vadd.f32 %v425, %v527
        %v560 = vadd.f32 %v426, %v528
        %v561 = vadd.f32 %v427, %v529
        %v562 = vadd.f32 %v428, %v530
        %v563 = vadd.f32 %v429, %v531
        %v564 = vadd.f32 %v430, %v532
        %v565 = vadd.f32 %v431, %v533
        %v566 = vadd.f32 %v432, %v534
        %v567 = vadd.f32 %v433, %v535
        %v568 = vadd.f32 %v434, %v536
        %v569 = vadd.f32 %v435, %v537
        %v570 = vadd.f32 %v436, %v538
        %v571 = vadd.f32 %v437, %v539
        %v572 = vadd.f32 %v438, %v540
        %v573 = vadd.f32 %v439, %v541
        %v574 = vadd.f32 %v440, %v542
        %v575 = vadd.f32 %v441, %v543
        %v576 = vadd.f32 %v442, %v544
        %v577 = vadd.f32 %v443, %v545
        %v578 = vadd.f32 %v444, %v546
        %v579 = vadd.f32 %v445, %v547
        %v580 = vadd.f32 %v446, %v548
        %v581 = vadd.f32 %v447, %v549
        %v582 = vadd.f32 %v448, %v550
        %v583 = vadd.f32 %v449, %v551
        %v584 = vadd.f32 %v450, %v552
        %v585 = vadd.f32 %v451, %v553
        %v586 = vadd.f32 %v452, %v554
        %v587 = vadd.f32 %v453, %v555
        %v588 = vadd.f32 %v454, %v556
        %v589 = vadd.f32 %v455, %v557
        %590 = vset.pattern.permute.xlu0 2
        %591 = vperm.xlu0 %590, %v289
        %v592 = vpop.permute.xlu0 %591
        %594 = vset.pattern.permute.xlu0 2
        %595 = vperm.xlu0 %594, %v290
        %v596 = vpop.permute.xlu0 %595
        %598 = vset.pattern.permute.xlu0 2
        %599 = vperm.xlu0 %598, %v291
        %v600 = vpop.permute.xlu0 %599
        %602 = vset.pattern.permute.xlu0 2
        %603 = vperm.xlu0 %602, %v292
        %v604 = vpop.permute.xlu0 %603
        %606 = vset.pattern.permute.xlu0 2
        %607 = vperm.xlu0 %606, %v293
        %v608 = vpop.permute.xlu0 %607
        %610 = vset.pattern.permute.xlu0 2
        %611 = vperm.xlu0 %610, %v294
        %v612 = vpop.permute.xlu0 %611
        %614 = vset.pattern.permute.xlu0 2
        %615 = vperm.xlu0 %614, %v295
        %v616 = vpop.permute.xlu0 %615
        %618 = vset.pattern.permute.xlu0 2
        %619 = vperm.xlu0 %618, %v296
        %v620 = vpop.permute.xlu0 %619
        %622 = vset.pattern.permute.xlu0 2
        %623 = vperm.xlu0 %622, %v297
        %v624 = vpop.permute.xlu0 %623
        %626 = vset.pattern.permute.xlu0 2
        %627 = vperm.xlu0 %626, %v298
        %v628 = vpop.permute.xlu0 %627
        %630 = vset.pattern.permute.xlu0 2
        %631 = vperm.xlu0 %630, %v299
        %v632 = vpop.permute.xlu0 %631
        %634 = vset.pattern.permute.xlu0 2
        %635 = vperm.xlu0 %634, %v300
        %v636 = vpop.permute.xlu0 %635
        %638 = vset.pattern.permute.xlu0 2
        %639 = vperm.xlu0 %638, %v301
        %v640 = vpop.permute.xlu0 %639
        %642 = vset.pattern.permute.xlu0 2
        %643 = vperm.xlu0 %642, %v302
        %v644 = vpop.permute.xlu0 %643
        %646 = vset.pattern.permute.xlu0 2
        %647 = vperm.xlu0 %646, %v303
        %v648 = vpop.permute.xlu0 %647
        %650 = vset.pattern.permute.xlu0 2
        %651 = vperm.xlu0 %650, %v304
        %v652 = vpop.permute.xlu0 %651
        %v654 = vperm.slane %v272, 2
        %v655 = vperm.slane %v272, 6
        %v658 = vperm.slane %v654, 2
        %v659 = vperm.slane %v655, 2
        %v660 = vmul.f32 %v592, %v658
        %v661 = vmul.f32 %v592, %v659
        %v662 = vmul.f32 %v596, %v658
        %v663 = vmul.f32 %v596, %v659
        %v664 = vmul.f32 %v600, %v658
        %v665 = vmul.f32 %v600, %v659
        %v666 = vmul.f32 %v604, %v658
        %v667 = vmul.f32 %v604, %v659
        %v668 = vmul.f32 %v608, %v658
        %v669 = vmul.f32 %v608, %v659
        %v670 = vmul.f32 %v612, %v658
        %v671 = vmul.f32 %v612, %v659
        %v672 = vmul.f32 %v616, %v658
        %v673 = vmul.f32 %v616, %v659
        %v674 = vmul.f32 %v620, %v658
        %v675 = vmul.f32 %v620, %v659
        %v676 = vmul.f32 %v624, %v658
        %v677 = vmul.f32 %v624, %v659
        %v678 = vmul.f32 %v628, %v658
        %v679 = vmul.f32 %v628, %v659
        %v680 = vmul.f32 %v632, %v658
        %v681 = vmul.f32 %v632, %v659
        %v682 = vmul.f32 %v636, %v658
        %v683 = vmul.f32 %v636, %v659
        %v684 = vmul.f32 %v640, %v658
        %v685 = vmul.f32 %v640, %v659
        %v686 = vmul.f32 %v644, %v658
        %v687 = vmul.f32 %v644, %v659
        %v688 = vmul.f32 %v648, %v658
        %v689 = vmul.f32 %v648, %v659
        %v690 = vmul.f32 %v652, %v658
        %v691 = vmul.f32 %v652, %v659
        %v692 = vadd.f32 %v558, %v660
        %v693 = vadd.f32 %v559, %v661
        %v694 = vadd.f32 %v560, %v662
        %v695 = vadd.f32 %v561, %v663
        %v696 = vadd.f32 %v562, %v664
        %v697 = vadd.f32 %v563, %v665
        %v698 = vadd.f32 %v564, %v666
        %v699 = vadd.f32 %v565, %v667
        %v700 = vadd.f32 %v566, %v668
        %v701 = vadd.f32 %v567, %v669
        %v702 = vadd.f32 %v568, %v670
        %v703 = vadd.f32 %v569, %v671
        %v704 = vadd.f32 %v570, %v672
        %v705 = vadd.f32 %v571, %v673
        %v706 = vadd.f32 %v572, %v674
        %v707 = vadd.f32 %v573, %v675
        %v708 = vadd.f32 %v574, %v676
        %v709 = vadd.f32 %v575, %v677
        %v710 = vadd.f32 %v576, %v678
        %v711 = vadd.f32 %v577, %v679
        %v712 = vadd.f32 %v578, %v680
        %v713 = vadd.f32 %v579, %v681
        %v714 = vadd.f32 %v580, %v682
        %v715 = vadd.f32 %v581, %v683
        %v716 = vadd.f32 %v582, %v684
        %v717 = vadd.f32 %v583, %v685
        %v718 = vadd.f32 %v584, %v686
        %v719 = vadd.f32 %v585, %v687
        %v720 = vadd.f32 %v586, %v688
        %v721 = vadd.f32 %v587, %v689
        %v722 = vadd.f32 %v588, %v690
        %v723 = vadd.f32 %v589, %v691
        %724 = vset.pattern.permute.xlu0 3
        %725 = vperm.xlu0 %724, %v289
        %v726 = vpop.permute.xlu0 %725
        %728 = vset.pattern.permute.xlu0 3
        %729 = vperm.xlu0 %728, %v290
        %v730 = vpop.permute.xlu0 %729
        %732 = vset.pattern.permute.xlu0 3
        %733 = vperm.xlu0 %732, %v291
        %v734 = vpop.permute.xlu0 %733
        %736 = vset.pattern.permute.xlu0 3
        %737 = vperm.xlu0 %736, %v292
        %v738 = vpop.permute.xlu0 %737
        %740 = vset.pattern.permute.xlu0 3
        %741 = vperm.xlu0 %740, %v293
        %v742 = vpop.permute.xlu0 %741
        %744 = vset.pattern.permute.xlu0 3
        %745 = vperm.xlu0 %744, %v294
        %v746 = vpop.permute.xlu0 %745
        %748 = vset.pattern.permute.xlu0 3
        %749 = vperm.xlu0 %748, %v295
        %v750 = vpop.permute.xlu0 %749
        %752 = vset.pattern.permute.xlu0 3
        %753 = vperm.xlu0 %752, %v296
        %v754 = vpop.permute.xlu0 %753
        %756 = vset.pattern.permute.xlu0 3
        %757 = vperm.xlu0 %756, %v297
        %v758 = vpop.permute.xlu0 %757
        %760 = vset.pattern.permute.xlu0 3
        %761 = vperm.xlu0 %760, %v298
        %v762 = vpop.permute.xlu0 %761
        %764 = vset.pattern.permute.xlu0 3
        %765 = vperm.xlu0 %764, %v299
        %v766 = vpop.permute.xlu0 %765
        %768 = vset.pattern.permute.xlu0 3
        %769 = vperm.xlu0 %768, %v300
        %v770 = vpop.permute.xlu0 %769
        %772 = vset.pattern.permute.xlu0 3
        %773 = vperm.xlu0 %772, %v301
        %v774 = vpop.permute.xlu0 %773
        %776 = vset.pattern.permute.xlu0 3
        %777 = vperm.xlu0 %776, %v302
        %v778 = vpop.permute.xlu0 %777
        %780 = vset.pattern.permute.xlu0 3
        %781 = vperm.xlu0 %780, %v303
        %v782 = vpop.permute.xlu0 %781
        %784 = vset.pattern.permute.xlu0 3
        %785 = vperm.xlu0 %784, %v304
        %v786 = vpop.permute.xlu0 %785
        %v788 = vperm.slane %v272, 3
        %v789 = vperm.slane %v272, 7
        %v792 = vperm.slane %v788, 3
        %v793 = vperm.slane %v789, 3
        %v794 = vmul.f32 %v726, %v792
        %v795 = vmul.f32 %v726, %v793
        %v796 = vmul.f32 %v730, %v792
        %v797 = vmul.f32 %v730, %v793
        %v798 = vmul.f32 %v734, %v792
        %v799 = vmul.f32 %v734, %v793
        %v800 = vmul.f32 %v738, %v792
        %v801 = vmul.f32 %v738, %v793
        %v802 = vmul.f32 %v742, %v792
        %v803 = vmul.f32 %v742, %v793
        %v804 = vmul.f32 %v746, %v792
        %v805 = vmul.f32 %v746, %v793
        %v806 = vmul.f32 %v750, %v792
        %v807 = vmul.f32 %v750, %v793
        %v808 = vmul.f32 %v754, %v792
        %v809 = vmul.f32 %v754, %v793
        %v810 = vmul.f32 %v758, %v792
        %v811 = vmul.f32 %v758, %v793
        %v812 = vmul.f32 %v762, %v792
        %v813 = vmul.f32 %v762, %v793
        %v814 = vmul.f32 %v766, %v792
        %v815 = vmul.f32 %v766, %v793
        %v816 = vmul.f32 %v770, %v792
        %v817 = vmul.f32 %v770, %v793
        %v818 = vmul.f32 %v774, %v792
        %v819 = vmul.f32 %v774, %v793
        %v820 = vmul.f32 %v778, %v792
        %v821 = vmul.f32 %v778, %v793
        %v822 = vmul.f32 %v782, %v792
        %v823 = vmul.f32 %v782, %v793
        %v824 = vmul.f32 %v786, %v792
        %v825 = vmul.f32 %v786, %v793
        %v826 = vadd.f32 %v692, %v794
        %v827 = vadd.f32 %v693, %v795
        %v828 = vadd.f32 %v694, %v796
        %v829 = vadd.f32 %v695, %v797
        %v830 = vadd.f32 %v696, %v798
        %v831 = vadd.f32 %v697, %v799
        %v832 = vadd.f32 %v698, %v800
        %v833 = vadd.f32 %v699, %v801
        %v834 = vadd.f32 %v700, %v802
        %v835 = vadd.f32 %v701, %v803
        %v836 = vadd.f32 %v702, %v804
        %v837 = vadd.f32 %v703, %v805
        %v838 = vadd.f32 %v704, %v806
        %v839 = vadd.f32 %v705, %v807
        %v840 = vadd.f32 %v706, %v808
        %v841 = vadd.f32 %v707, %v809
        %v842 = vadd.f32 %v708, %v810
        %v843 = vadd.f32 %v709, %v811
        %v844 = vadd.f32 %v710, %v812
        %v845 = vadd.f32 %v711, %v813
        %v846 = vadd.f32 %v712, %v814
        %v847 = vadd.f32 %v713, %v815
        %v848 = vadd.f32 %v714, %v816
        %v849 = vadd.f32 %v715, %v817
        %v850 = vadd.f32 %v716, %v818
        %v851 = vadd.f32 %v717, %v819
        %v852 = vadd.f32 %v718, %v820
        %v853 = vadd.f32 %v719, %v821
        %v854 = vadd.f32 %v720, %v822
        %v855 = vadd.f32 %v721, %v823
        %v856 = vadd.f32 %v722, %v824
        %v857 = vadd.f32 %v723, %v825
        %v858 = vld [vmem:[%s2] sm:$0xff]
        %v859 = vld [vmem:[%s2 + $0x8] sm:$0xff]
        %v860 = vld [vmem:[%s2 + $0x10] sm:$0xff]
        %v861 = vld [vmem:[%s2 + $0x18] sm:$0xff]
        %v862 = vld [vmem:[%s2 + $0x20] sm:$0xff]
        %v863 = vld [vmem:[%s2 + $0x28] sm:$0xff]
        %v864 = vld [vmem:[%s2 + $0x30] sm:$0xff]
        %v865 = vld [vmem:[%s2 + $0x38] sm:$0xff]
        %v866 = vld [vmem:[%s2 + $0x40] sm:$0xff]
        %v867 = vld [vmem:[%s2 + $0x48] sm:$0xff]
        %v868 = vld [vmem:[%s2 + $0x50] sm:$0xff]
        %v869 = vld [vmem:[%s2 + $0x58] sm:$0xff]
        %v870 = vld [vmem:[%s2 + $0x60] sm:$0xff]
        %v871 = vld [vmem:[%s2 + $0x68] sm:$0xff]
        %v872 = vld [vmem:[%s2 + $0x70] sm:$0xff]
        %v873 = vld [vmem:[%s2 + $0x78] sm:$0xff]
        %875 = vset.pattern.permute.xlu0 0
        %876 = vperm.xlu0 %875, %v858
        %v877 = vpop.permute.xlu0 %876
        %880 = vset.pattern.permute.xlu0 0
        %881 = vperm.xlu0 %880, %v859
        %v882 = vpop.permute.xlu0 %881
        %885 = vset.pattern.permute.xlu0 0
        %886 = vperm.xlu0 %885, %v860
        %v887 = vpop.permute.xlu0 %886
        %890 = vset.pattern.permute.xlu0 0
        %891 = vperm.xlu0 %890, %v861
        %v892 = vpop.permute.xlu0 %891
        %895 = vset.pattern.permute.xlu0 0
        %896 = vperm.xlu0 %895, %v862
        %v897 = vpop.permute.xlu0 %896
        %900 = vset.pattern.permute.xlu0 0
        %901 = vperm.xlu0 %900, %v863
        %v902 = vpop.permute.xlu0 %901
        %905 = vset.pattern.permute.xlu0 0
        %906 = vperm.xlu0 %905, %v864
        %v907 = vpop.permute.xlu0 %906
        %910 = vset.pattern.permute.xlu0 0
        %911 = vperm.xlu0 %910, %v865
        %v912 = vpop.permute.xlu0 %911
        %915 = vset.pattern.permute.xlu0 0
        %916 = vperm.xlu0 %915, %v866
        %v917 = vpop.permute.xlu0 %916
        %920 = vset.pattern.permute.xlu0 0
        %921 = vperm.xlu0 %920, %v867
        %v922 = vpop.permute.xlu0 %921
        %925 = vset.pattern.permute.xlu0 0
        %926 = vperm.xlu0 %925, %v868
        %v927 = vpop.permute.xlu0 %926
        %930 = vset.pattern.permute.xlu0 0
        %931 = vperm.xlu0 %930, %v869
        %v932 = vpop.permute.xlu0 %931
        %935 = vset.pattern.permute.xlu0 0
        %936 = vperm.xlu0 %935, %v870
        %v937 = vpop.permute.xlu0 %936
        %940 = vset.pattern.permute.xlu0 0
        %941 = vperm.xlu0 %940, %v871
        %v942 = vpop.permute.xlu0 %941
        %945 = vset.pattern.permute.xlu0 0
        %946 = vperm.xlu0 %945, %v872
        %v947 = vpop.permute.xlu0 %946
        %950 = vset.pattern.permute.xlu0 0
        %951 = vperm.xlu0 %950, %v873
        %v952 = vpop.permute.xlu0 %951
        %v954 = vadd.f32 %v826, %v877
        %v955 = vadd.f32 %v827, %v877
        %v956 = vadd.f32 %v828, %v882
        %v957 = vadd.f32 %v829, %v882
        %v958 = vadd.f32 %v830, %v887
        %v959 = vadd.f32 %v831, %v887
        %v960 = vadd.f32 %v832, %v892
        %v961 = vadd.f32 %v833, %v892
        %v962 = vadd.f32 %v834, %v897
        %v963 = vadd.f32 %v835, %v897
        %v964 = vadd.f32 %v836, %v902
        %v965 = vadd.f32 %v837, %v902
        %v966 = vadd.f32 %v838, %v907
        %v967 = vadd.f32 %v839, %v907
        %v968 = vadd.f32 %v840, %v912
        %v969 = vadd.f32 %v841, %v912
        %v970 = vadd.f32 %v842, %v917
        %v971 = vadd.f32 %v843, %v917
        %v972 = vadd.f32 %v844, %v922
        %v973 = vadd.f32 %v845, %v922
        %v974 = vadd.f32 %v846, %v927
        %v975 = vadd.f32 %v847, %v927
        %v976 = vadd.f32 %v848, %v932
        %v977 = vadd.f32 %v849, %v932
        %v978 = vadd.f32 %v850, %v937
        %v979 = vadd.f32 %v851, %v937
        %v980 = vadd.f32 %v852, %v942
        %v981 = vadd.f32 %v853, %v942
        %v982 = vadd.f32 %v854, %v947
        %v983 = vadd.f32 %v855, %v947
        %v984 = vadd.f32 %v856, %v952
        %v985 = vadd.f32 %v857, %v952
        %v986 = vmax.f32 %v954, 0.0
        %v987 = vmax.f32 %v955, 0.0
        %v988 = vmax.f32 %v956, 0.0
        %v989 = vmax.f32 %v957, 0.0
        %v990 = vmax.f32 %v958, 0.0
        %v991 = vmax.f32 %v959, 0.0
        %v992 = vmax.f32 %v960, 0.0
        %v993 = vmax.f32 %v961, 0.0
        %v994 = vmax.f32 %v962, 0.0
        %v995 = vmax.f32 %v963, 0.0
        %v996 = vmax.f32 %v964, 0.0
        %v997 = vmax.f32 %v965, 0.0
        %v998 = vmax.f32 %v966, 0.0
        %v999 = vmax.f32 %v967, 0.0
        %v1000 = vmax.f32 %v968, 0.0
        %v1001 = vmax.f32 %v969, 0.0
        %v1002 = vmax.f32 %v970, 0.0
        %v1003 = vmax.f32 %v971, 0.0
        %v1004 = vmax.f32 %v972, 0.0
        %v1005 = vmax.f32 %v973, 0.0
        %v1006 = vmax.f32 %v974, 0.0
        %v1007 = vmax.f32 %v975, 0.0
        %v1008 = vmax.f32 %v976, 0.0
        %v1009 = vmax.f32 %v977, 0.0
        %v1010 = vmax.f32 %v978, 0.0
        %v1011 = vmax.f32 %v979, 0.0
        %v1012 = vmax.f32 %v980, 0.0
        %v1013 = vmax.f32 %v981, 0.0
        %v1014 = vmax.f32 %v982, 0.0
        %v1015 = vmax.f32 %v983, 0.0
        %v1016 = vmax.f32 %v984, 0.0
        %v1017 = vmax.f32 %v985, 0.0
        %v1018 = vld [vmem:[#allocation2] sm:$0xff]
        %v1019 = vld [vmem:[#allocation2 + $0x8] sm:$0xff]
        %v1020 = vld [vmem:[#allocation2 + $0x10] sm:$0xff]
        %v1021 = vld [vmem:[#allocation2 + $0x18] sm:$0xff]
        %v1022 = vld [vmem:[#allocation2 + $0x20] sm:$0xff]
        %v1023 = vld [vmem:[#allocation2 + $0x28] sm:$0xff]
        %v1024 = vld [vmem:[#allocation2 + $0x30] sm:$0xff]
        %v1025 = vld [vmem:[#allocation2 + $0x38] sm:$0xff]
        %v1026 = vld [vmem:[#allocation2 + $0x40] sm:$0xff]
        %v1027 = vld [vmem:[#allocation2 + $0x48] sm:$0xff]
        %v1028 = vld [vmem:[#allocation2 + $0x50] sm:$0xff]
        %v1029 = vld [vmem:[#allocation2 + $0x58] sm:$0xff]
        %v1030 = vld [vmem:[#allocation2 + $0x60] sm:$0xff]
        %v1031 = vld [vmem:[#allocation2 + $0x68] sm:$0xff]
        %v1032 = vld [vmem:[#allocation2 + $0x70] sm:$0xff]
        %v1033 = vld [vmem:[#allocation2 + $0x78] sm:$0xff]
        %v1034 = vadd.f32 %v986, %v987
        %1035 = vadd.xlane.f32.xlu0 %v1034
        %v1036 = vpop.xlane.xlu0 %1035
        %v1037 = vadd.f32 %v988, %v989
        %1038 = vadd.xlane.f32.xlu0 %v1037
        %v1039 = vpop.xlane.xlu0 %1038
        %v1040 = vadd.f32 %v990, %v991
        %1041 = vadd.xlane.f32.xlu0 %v1040
        %v1042 = vpop.xlane.xlu0 %1041
        %v1043 = vadd.f32 %v992, %v993
        %1044 = vadd.xlane.f32.xlu0 %v1043
        %v1045 = vpop.xlane.xlu0 %1044
        %v1046 = vadd.f32 %v994, %v995
        %1047 = vadd.xlane.f32.xlu0 %v1046
        %v1048 = vpop.xlane.xlu0 %1047
        %v1049 = vadd.f32 %v996, %v997
        %1050 = vadd.xlane.f32.xlu0 %v1049
        %v1051 = vpop.xlane.xlu0 %1050
        %v1052 = vadd.f32 %v998, %v999
        %1053 = vadd.xlane.f32.xlu0 %v1052
        %v1054 = vpop.xlane.xlu0 %1053
        %v1055 = vadd.f32 %v1000, %v1001
        %1056 = vadd.xlane.f32.xlu0 %v1055
        %v1057 = vpop.xlane.xlu0 %1056
        %v1058 = vadd.f32 %v1002, %v1003
        %1059 = vadd.xlane.f32.xlu0 %v1058
        %v1060 = vpop.xlane.xlu0 %1059
        %v1061 = vadd.f32 %v1004, %v1005
        %1062 = vadd.xlane.f32.xlu0 %v1061
        %v1063 = vpop.xlane.xlu0 %1062
        %v1064 = vadd.f32 %v1006, %v1007
        %1065 = vadd.xlane.f32.xlu0 %v1064
        %v1066 = vpop.xlane.xlu0 %1065
        %v1067 = vadd.f32 %v1008, %v1009
        %1068 = vadd.xlane.f32.xlu0 %v1067
        %v1069 = vpop.xlane.xlu0 %1068
        %v1070 = vadd.f32 %v1010, %v1011
        %1071 = vadd.xlane.f32.xlu0 %v1070
        %v1072 = vpop.xlane.xlu0 %1071
        %v1073 = vadd.f32 %v1012, %v1013
        %1074 = vadd.xlane.f32.xlu0 %v1073
        %v1075 = vpop.xlane.xlu0 %1074
        %v1076 = vadd.f32 %v1014, %v1015
        %1077 = vadd.xlane.f32.xlu0 %v1076
        %v1078 = vpop.xlane.xlu0 %1077
        %v1079 = vadd.f32 %v1016, %v1017
        %1080 = vadd.xlane.f32.xlu0 %v1079
        %v1081 = vpop.xlane.xlu0 %1080
        %v1082 = vadd.f32 %v1018, %v1036
        %v1083 = vadd.f32 %v1019, %v1039
        %v1084 = vadd.f32 %v1020, %v1042
        %v1085 = vadd.f32 %v1021, %v1045
        %v1086 = vadd.f32 %v1022, %v1048
        %v1087 = vadd.f32 %v1023, %v1051
        %v1088 = vadd.f32 %v1024, %v1054
        %v1089 = vadd.f32 %v1025, %v1057
        %v1090 = vadd.f32 %v1026, %v1060
        %v1091 = vadd.f32 %v1027, %v1063
        %v1092 = vadd.f32 %v1028, %v1066
        %v1093 = vadd.f32 %v1029, %v1069
        %v1094 = vadd.f32 %v1030, %v1072
        %v1095 = vadd.f32 %v1031, %v1075
        %v1096 = vadd.f32 %v1032, %v1078
        %v1097 = vadd.f32 %v1033, %v1081
        %vm1098 = vcmask 7168
        %1099 = vst.msk [vmem:[#allocation2] sm:$0xff] %vm1098, %v1082
        %1100 = vst.msk [vmem:[#allocation2 + $0x8] sm:$0xff] %vm1098, %v1083
        %1101 = vst.msk [vmem:[#allocation2 + $0x10] sm:$0xff] %vm1098, %v1084
        %1102 = vst.msk [vmem:[#allocation2 + $0x18] sm:$0xff] %vm1098, %v1085
        %1103 = vst.msk [vmem:[#allocation2 + $0x20] sm:$0xff] %vm1098, %v1086
        %1104 = vst.msk [vmem:[#allocation2 + $0x28] sm:$0xff] %vm1098, %v1087
        %1105 = vst.msk [vmem:[#allocation2 + $0x30] sm:$0xff] %vm1098, %v1088
        %1106 = vst.msk [vmem:[#allocation2 + $0x38] sm:$0xff] %vm1098, %v1089
        %1107 = vst.msk [vmem:[#allocation2 + $0x40] sm:$0xff] %vm1098, %v1090
        %1108 = vst.msk [vmem:[#allocation2 + $0x48] sm:$0xff] %vm1098, %v1091
        %1109 = vst.msk [vmem:[#allocation2 + $0x50] sm:$0xff] %vm1098, %v1092
        %1110 = vst.msk [vmem:[#allocation2 + $0x58] sm:$0xff] %vm1098, %v1093
        %1111 = vst.msk [vmem:[#allocation2 + $0x60] sm:$0xff] %vm1098, %v1094
        %1112 = vst.msk [vmem:[#allocation2 + $0x68] sm:$0xff] %vm1098, %v1095
        %1113 = vst.msk [vmem:[#allocation2 + $0x70] sm:$0xff] %vm1098, %v1096
        %1114 = vst.msk [vmem:[#allocation2 + $0x78] sm:$0xff] %vm1098, %v1097
        // Predicated region
        $region45: #{classifier_forward.1} parent=39 // pred_check
          %p1115 = pneg %p250
        $region46: #{classifier_forward.1} parent=39 // pred_check_branch
          %1117 = sbr.rel (%p1115) target = $region48
        $region47: #{classifier_forward.1} parent=39 // pred_region
          %v1118 = vld [vmem:[#allocation2] sm:$0xff]
          %v1119 = vld [vmem:[#allocation2 + $0x8] sm:$0xff]
          %v1120 = vld [vmem:[#allocation2 + $0x10] sm:$0xff]
          %v1121 = vld [vmem:[#allocation2 + $0x18] sm:$0xff]
          %v1122 = vld [vmem:[#allocation2 + $0x20] sm:$0xff]
          %v1123 = vld [vmem:[#allocation2 + $0x28] sm:$0xff]
          %v1124 = vld [vmem:[#allocation2 + $0x30] sm:$0xff]
          %v1125 = vld [vmem:[#allocation2 + $0x38] sm:$0xff]
          %v1126 = vld [vmem:[#allocation2 + $0x40] sm:$0xff]
          %v1127 = vld [vmem:[#allocation2 + $0x48] sm:$0xff]
          %v1128 = vld [vmem:[#allocation2 + $0x50] sm:$0xff]
          %v1129 = vld [vmem:[#allocation2 + $0x58] sm:$0xff]
          %v1130 = vld [vmem:[#allocation2 + $0x60] sm:$0xff]
          %v1131 = vld [vmem:[#allocation2 + $0x68] sm:$0xff]
          %v1132 = vld [vmem:[#allocation2 + $0x70] sm:$0xff]
          %v1133 = vld [vmem:[#allocation2 + $0x78] sm:$0xff]
          %v1134 = vmul.f32 %v1118, 0.00390625
          %v1135 = vmul.f32 %v1119, 0.00390625
          %v1136 = vmul.f32 %v1120, 0.00390625
          %v1137 = vmul.f32 %v1121, 0.00390625
          %v1138 = vmul.f32 %v1122, 0.00390625
          %v1139 = vmul.f32 %v1123, 0.00390625
          %v1140 = vmul.f32 %v1124, 0.00390625
          %v1141 = vmul.f32 %v1125, 0.00390625
          %v1142 = vmul.f32 %v1126, 0.00390625
          %v1143 = vmul.f32 %v1127, 0.00390625
          %v1144 = vmul.f32 %v1128, 0.00390625
          %v1145 = vmul.f32 %v1129, 0.00390625
          %v1146 = vmul.f32 %v1130, 0.00390625
          %v1147 = vmul.f32 %v1131, 0.00390625
          %v1148 = vmul.f32 %v1132, 0.00390625
          %v1149 = vmul.f32 %v1133, 0.00390625
          %v1150 = vpack.c.bf16 %v1134, %v1134
          %v1151 = vpack.c.bf16 %v1135, %v1135
          %v1152 = vpack.c.bf16 %v1136, %v1136
          %v1153 = vpack.c.bf16 %v1137, %v1137
          %v1154 = vpack.c.bf16 %v1138, %v1138
          %v1155 = vpack.c.bf16 %v1139, %v1139
          %v1156 = vpack.c.bf16 %v1140, %v1140
          %v1157 = vpack.c.bf16 %v1141, %v1141
          %v1158 = vpack.c.bf16 %v1142, %v1142
          %v1159 = vpack.c.bf16 %v1143, %v1143
          %v1160 = vpack.c.bf16 %v1144, %v1144
          %v1161 = vpack.c.bf16 %v1145, %v1145
          %v1162 = vpack.c.bf16 %v1146, %v1146
          %v1163 = vpack.c.bf16 %v1147, %v1147
          %v1164 = vpack.c.bf16 %v1148, %v1148
          %v1165 = vpack.c.bf16 %v1149, %v1149
          %v1166 = vunpack.c.l.bf16 %v1150
          %v1167 = vunpack.c.l.bf16 %v1151
          %v1168 = vunpack.c.l.bf16 %v1152
          %v1169 = vunpack.c.l.bf16 %v1153
          %v1170 = vunpack.c.l.bf16 %v1154
          %v1171 = vunpack.c.l.bf16 %v1155
          %v1172 = vunpack.c.l.bf16 %v1156
          %v1173 = vunpack.c.l.bf16 %v1157
          %v1174 = vunpack.c.l.bf16 %v1158
          %v1175 = vunpack.c.l.bf16 %v1159
          %v1176 = vunpack.c.l.bf16 %v1160
          %v1177 = vunpack.c.l.bf16 %v1161
          %v1178 = vunpack.c.l.bf16 %v1162
          %v1179 = vunpack.c.l.bf16 %v1163
          %v1180 = vunpack.c.l.bf16 %v1164
          %v1181 = vunpack.c.l.bf16 %v1165
          %v1182 = vld [vmem:[%s3] sm:$0xf]
          %v1183 = vld [vmem:[%s3 + $0x4] sm:$0xf]
          %v1184 = vld [vmem:[%s3 + $0x8] sm:$0xf]
          %v1185 = vld [vmem:[%s3 + $0xc] sm:$0xf]
          %v1186 = vld [vmem:[%s3 + $0x10] sm:$0xf]
          %v1187 = vld [vmem:[%s3 + $0x14] sm:$0xf]
          %v1188 = vld [vmem:[%s3 + $0x18] sm:$0xf]
          %v1189 = vld [vmem:[%s3 + $0x1c] sm:$0xf]
          %v1190 = vld [vmem:[%s3 + $0x20] sm:$0xf]
          %v1191 = vld [vmem:[%s3 + $0x24] sm:$0xf]
          %v1192 = vld [vmem:[%s3 + $0x28] sm:$0xf]
          %v1193 = vld [vmem:[%s3 + $0x2c] sm:$0xf]
          %v1194 = vld [vmem:[%s3 + $0x30] sm:$0xf]
          %v1195 = vld [vmem:[%s3 + $0x34] sm:$0xf]
          %v1196 = vld [vmem:[%s3 + $0x38] sm:$0xf]
          %v1197 = vld [vmem:[%s3 + $0x3c] sm:$0xf]
          %v1198 = vunpack.c.l.bf16 %v1182
          %v1199 = vunpack.c.l.bf16 %v1183
          %v1200 = vunpack.c.l.bf16 %v1184
          %v1201 = vunpack.c.l.bf16 %v1185
          %v1202 = vunpack.c.l.bf16 %v1186
          %v1203 = vunpack.c.l.bf16 %v1187
          %v1204 = vunpack.c.l.bf16 %v1188
          %v1205 = vunpack.c.l.bf16 %v1189
          %v1206 = vunpack.c.l.bf16 %v1190
          %v1207 = vunpack.c.l.bf16 %v1191
          %v1208 = vunpack.c.l.bf16 %v1192
          %v1209 = vunpack.c.l.bf16 %v1193
          %v1210 = vunpack.c.l.bf16 %v1194
          %v1211 = vunpack.c.l.bf16 %v1195
          %v1212 = vunpack.c.l.bf16 %v1196
          %v1213 = vunpack.c.l.bf16 %v1197
          %1215 = vset.pattern.permute.xlu0 0
          %1216 = vperm.xlu0 %1215, %v1166
          %v1217 = vpop.permute.xlu0 %1216
          %1220 = vset.pattern.permute.xlu0 0
          %1221 = vperm.xlu0 %1220, %v1167
          %v1222 = vpop.permute.xlu0 %1221
          %1225 = vset.pattern.permute.xlu0 0
          %1226 = vperm.xlu0 %1225, %v1168
          %v1227 = vpop.permute.xlu0 %1226
          %1230 = vset.pattern.permute.xlu0 0
          %1231 = vperm.xlu0 %1230, %v1169
          %v1232 = vpop.permute.xlu0 %1231
          %1235 = vset.pattern.permute.xlu0 0
          %1236 = vperm.xlu0 %1235, %v1170
          %v1237 = vpop.permute.xlu0 %1236
          %1240 = vset.pattern.permute.xlu0 0
          %1241 = vperm.xlu0 %1240, %v1171
          %v1242 = vpop.permute.xlu0 %1241
          %1245 = vset.pattern.permute.xlu0 0
          %1246 = vperm.xlu0 %1245, %v1172
          %v1247 = vpop.permute.xlu0 %1246
          %1250 = vset.pattern.permute.xlu0 0
          %1251 = vperm.xlu0 %1250, %v1173
          %v1252 = vpop.permute.xlu0 %1251
          %1255 = vset.pattern.permute.xlu0 0
          %1256 = vperm.xlu0 %1255, %v1174
          %v1257 = vpop.permute.xlu0 %1256
          %1260 = vset.pattern.permute.xlu0 0
          %1261 = vperm.xlu0 %1260, %v1175
          %v1262 = vpop.permute.xlu0 %1261
          %1265 = vset.pattern.permute.xlu0 0
          %1266 = vperm.xlu0 %1265, %v1176
          %v1267 = vpop.permute.xlu0 %1266
          %1270 = vset.pattern.permute.xlu0 0
          %1271 = vperm.xlu0 %1270, %v1177
          %v1272 = vpop.permute.xlu0 %1271
          %1275 = vset.pattern.permute.xlu0 0
          %1276 = vperm.xlu0 %1275, %v1178
          %v1277 = vpop.permute.xlu0 %1276
          %1280 = vset.pattern.permute.xlu0 0
          %1281 = vperm.xlu0 %1280, %v1179
          %v1282 = vpop.permute.xlu0 %1281
          %1285 = vset.pattern.permute.xlu0 0
          %1286 = vperm.xlu0 %1285, %v1180
          %v1287 = vpop.permute.xlu0 %1286
          %1290 = vset.pattern.permute.xlu0 0
          %1291 = vperm.xlu0 %1290, %v1181
          %v1292 = vpop.permute.xlu0 %1291
          %v1294 = vmul.f32 %v1217, %v1198
          %v1295 = vmul.f32 %v1222, %v1199
          %v1296 = vmul.f32 %v1227, %v1200
          %v1297 = vmul.f32 %v1232, %v1201
          %v1298 = vmul.f32 %v1237, %v1202
          %v1299 = vmul.f32 %v1242, %v1203
          %v1300 = vmul.f32 %v1247, %v1204
          %v1301 = vmul.f32 %v1252, %v1205
          %v1302 = vmul.f32 %v1257, %v1206
          %v1303 = vmul.f32 %v1262, %v1207
          %v1304 = vmul.f32 %v1267, %v1208
          %v1305 = vmul.f32 %v1272, %v1209
          %v1306 = vmul.f32 %v1277, %v1210
          %v1307 = vmul.f32 %v1282, %v1211
          %v1308 = vmul.f32 %v1287, %v1212
          %v1309 = vmul.f32 %v1292, %v1213
          %v1310 = vadd.f32 %v1294, %v1295
          %v1311 = vadd.f32 %v1310, %v1296
          %v1312 = vadd.f32 %v1311, %v1297
          %v1313 = vadd.f32 %v1312, %v1298
          %v1314 = vadd.f32 %v1313, %v1299
          %v1315 = vadd.f32 %v1314, %v1300
          %v1316 = vadd.f32 %v1315, %v1301
          %v1317 = vadd.f32 %v1316, %v1302
          %v1318 = vadd.f32 %v1317, %v1303
          %v1319 = vadd.f32 %v1318, %v1304
          %v1320 = vadd.f32 %v1319, %v1305
          %v1321 = vadd.f32 %v1320, %v1306
          %v1322 = vadd.f32 %v1321, %v1307
          %v1323 = vadd.f32 %v1322, %v1308
          %v1324 = vadd.f32 %v1323, %v1309
          %v1325 = vrot.slane %v1324, 4
          %v1326 = vadd.f32 %v1324, %v1325
          %v1327 = vrot.slane %v1326, 2
          %v1328 = vadd.f32 %v1326, %v1327
          %v1329 = vrot.slane %v1328, 1
          %v1330 = vadd.f32 %v1328, %v1329
          %v1331 = vld [vmem:[%s4] sm:$0x1]
          %v1332 = vadd.f32 %v1330, %v1331
          %1333 = vst [vmem:[%s239] sm:$0x1] %v1332
        $region48: #{classifier_forward.1} parent=39 // pred_fallthru
          _
        %s1334 = sand.u32 %s151, 1
        %s1335 = scalar_lea.sflag [#allocation4], %s1334
        %s1336 = sand.u32 %s151, 1
        %s1337 = scalar_lea.vmem [#allocation3], %s1336
        // Predicated region
        $region49: #{classifier_forward.1} parent=39 // pred_check
          %p1338 = pneg %p161
        $region50: #{classifier_forward.1} parent=39 // pred_check_branch
          %1340 = sbr.rel (%p1338) target = $region52
        $region51: #{classifier_forward.1} parent=39 // pred_region
          %1342 = vsyncadd %s1335, 0
          %s1343 = scalar_lea.hbm %s5, %s23
          %s1345 = sshll.u32 %s1337, 4
          %s1346 = int_to_ptr.vmem [resolvable:$true] %s1345
          %s1347 = sshll.u32 %s1343, 4
          %s1348 = int_to_ptr.hbm [resolvable:$true] %s1347
          %1350 = dma.vmem_to_hbm [thread:$0]  %s1346, 16, %s1348, %s1335
        $region52: #{classifier_forward.1} parent=39 // pred_fallthru
          _
      $region40: #{classifier_forward.1} parent=5 // pred_fallthru
        _
      %p1351 = scmp.le.s32.totalorder 2, %s14
      // Predicated region
      $region53: #{classifier_forward.1} parent=5 // pred_check
        %p1352 = pneg %p1351
      $region54: #{classifier_forward.1} parent=5 // pred_check_branch
        %1354 = sbr.rel (%p1352) target = $region56
      $region55: #{classifier_forward.1} parent=5 // pred_region
        %s1355 = ssub.s32 %s14, 2
        // Predicated region
        $region57: #{classifier_forward.1} parent=55 // pred_check
          %p1356 = pneg %p167
        $region58: #{classifier_forward.1} parent=55 // pred_check_branch
          %1358 = sbr.rel (%p1356) target = $region60
        $region59: #{classifier_forward.1} parent=55 // pred_region
          %s1359 = sand.u32 %s152, 1
          %s1360 = scalar_lea.sflag [#allocation4], %s1359
          %s1361 = sand.u32 %s152, 1
          %s1362 = scalar_lea.vmem [#allocation3], %s1361
          %1364 = dma.done %s1360, 16
        $region60: #{classifier_forward.1} parent=55 // pred_fallthru
          _
      $region56: #{classifier_forward.1} parent=5 // pred_fallthru
        _
    $region6: #{classifier_forward.1} parent=1 // loop_footer
      %s18 = sadd.s32 1, %s14
    $region7: #{classifier_forward.1} parent=1 // loop_footer_branch
      %13 = sbr.rel target = $region3
    $region8: #{classifier_forward.1} parent=1 // loop_exit
      _
    %1365 = vsyncpa [#allocation4], 1
    %s1366 = scalar_lea.sflag [#allocation4], 1
    %1367 = vsyncpa %s1366, 1

// kernel: classifier_forward.1
$region0: #{classifier_forward.1}
  #allocation0 [shape = 'u32[]', space=smem, size = 0x4, offset = 0x4, fixed_abs, tag = 'smem constant byte address 0x4 - core index']
  #allocation1 [shape = 'u32[72,128]{1,0:T(1,128)}', space=vmem, size = 0x9000, scoped, tag = 'internal scratch']
  #allocation2 [shape = 'f32[128,1]{1,0:T(8,128)}', space=vmem, size = 0x10000, scoped, tag = 'scratch operand']
  %s0 = inlined_call_operand.vmem [shape: bf16[2,4,256], index: 0, kind: input, shape index: {}]
  %s1 = inlined_call_operand.vmem [shape: bf16[128,4], index: 1, kind: input, shape index: {}]
  %s2 = inlined_call_operand.vmem [shape: f32[128,1], index: 2, kind: input, shape index: {}]
  %s3 = inlined_call_operand.vmem [shape: bf16[128,128], index: 3, kind: input, shape index: {}]
  %s4 = inlined_call_operand.vmem [shape: f32[1,128], index: 4, kind: input, shape index: {}]
  %s5 = inlined_call_operand.hbm [shape: f32[2,1,128], index: 5, kind: output, shape index: {}]
  %s6 = sld [smem:[#allocation0]]
  $region61: #{classifier_forward.1} parent=0
    _
  %s8 = ssub.s32 1, %s6
  %s9 = scalar_select 0, %s8, %s6
  $region1: #{classifier_forward.1} parent=0
    #allocation3 [shape = 'u8[1024]{0}', space=vmem, size = 0x400, scoped, tag = 'output window, operand 0']
    #allocation4 [shape = 's32[2]{0}', space=sflag, size = 0x8, scoped, tag = 'scoped memory for classifier_forward.1']
    %10 = vsyncpa [#allocation4], 0
    %s11 = scalar_lea.sflag [#allocation4], 1
    %12 = vsyncpa %s11, 0
    loop: start=0, step=1, limit=4
    $region2: #{classifier_forward.1} parent=1 // loop_pre_header
      _
    $region3: #{classifier_forward.1} parent=1 // loop_header
      %s14 = sphi 0, %s18
      %p15 = scmp.ge.s32.totalorder %s14, 4
      %s21 = sphi 0, %s33
      %s22 = sphi 0, %s29
      %s23 = sphi 0, %s21
      %s24 = sphi 0, %s22
      %s25 = sphi 0, %s23
      %s26 = sphi 0, %s24
      %s38 = sphi 0, %s40
      %s41 = sphi 0, %s38
      %s42 = sphi 0, %s41
      %s58 = sphi 0, %s42
      %s62 = sphi 0, %s62
      %s64 = sphi 0, %s62
      %s65 = sphi 0, %s64
      %s79 = sphi 0, %s65
      %s83 = sphi 0, %s83
      %s85 = sphi 0, %s83
      %s86 = sphi 0, %s85
      %s100 = sphi 0, %s86
      %s104 = sphi 0, %s104
      %s106 = sphi 0, %s104
      %s107 = sphi 0, %s106
      %s121 = sphi 0, %s107
      %s125 = sphi 0, %s125
      %s127 = sphi 0, %s125
      %s128 = sphi 0, %s127
      %s142 = sphi 0, %s128
      %s148 = sphi 0, %s150
      %s151 = sphi 0, %s148
      %s152 = sphi 0, %s151
      %s168 = sphi 0, %s152
    $region4: #{classifier_forward.1} parent=1 // loop_header_branch
      %17 = sbr.rel (%p15) target = $region8
    $region5: #{classifier_forward.1} parent=1 // loop_body
      %s19 = ssub.s32 %s14, 1
      %s20 = ssub.s32 %s14, 2
      %s27 = sadd.s32 1, %s22
      %p28 = scmp.ge.s32.totalorder %s27, 1
      %s29 = scalar_select %p28, 0, %s27
      %s30 = sadd.s32 1, %s21
      %s31 = scalar_select %p28, %s30, %s21
      %p32 = scmp.ge.s32.totalorder %s31, 2
      %s33 = scalar_select %p32, 0, %s31
      %s34 = ssub.s32 %s21, %s33
      %s35 = ssub.s32 %s22, %s29
      %s36 = sor.u32 %s34, %s35
      %p37 = scmp.eq.s32.totalorder %s36, 0
      %s39 = sadd.s32 %s38, 1
      %s40 = scalar_select %p37, %s38, %s39
      %p43 = pneg %p37
      %p44 = scmp.eq.s32.totalorder %s14, 1
      %p45 = por %p43, %p44
      %p46 = scmp.ne.s32.totalorder %s38, %s41
      %p47 = scmp.eq.s32.totalorder %s14, 0
      %p48 = por %p46, %p47
      %p49 = scmp.ne.s32.totalorder %s38, %s41
      %p50 = scmp.eq.s32.totalorder %s19, 1
      %p51 = por %p49, %p50
      %p52 = scmp.ne.s32.totalorder %s41, %s42
      %p53 = scmp.eq.s32.totalorder %s19, 0
      %p54 = por %p52, %p53
      %p55 = scmp.ne.s32.totalorder %s41, %s42
      %p56 = scmp.eq.s32.totalorder %s20, 1
      %p57 = por %p55, %p56
      %p59 = scmp.ne.s32.totalorder %s42, %s58
      %p60 = scmp.eq.s32.totalorder %s20, 0
      %p61 = por %p59, %p60
      %s63 = sadd.s32 %s62, 1
      %p66 = scmp.eq.s32.totalorder %s14, 1
      %p67 = scmp.ne.s32.totalorder %s62, %s64
      %p68 = scmp.eq.s32.totalorder %s14, 0
      %p69 = por %p67, %p68
      %p70 = scmp.ne.s32.totalorder %s62, %s64
      %p71 = scmp.eq.s32.totalorder %s19, 1
      %p72 = por %p70, %p71
      %p73 = scmp.ne.s32.totalorder %s64, %s65
      %p74 = scmp.eq.s32.totalorder %s19, 0
      %p75 = por %p73, %p74
      %p76 = scmp.ne.s32.totalorder %s64, %s65
      %p77 = scmp.eq.s32.totalorder %s20, 1
      %p78 = por %p76, %p77
      %p80 = scmp.ne.s32.totalorder %s65, %s79
      %p81 = scmp.eq.s32.totalorder %s20, 0
      %p82 = por %p80, %p81
      %s84 = sadd.s32 %s83, 1
      %p87 = scmp.eq.s32.totalorder %s14, 1
      %p88 = scmp.ne.s32.totalorder %s83, %s85
      %p89 = scmp.eq.s32.totalorder %s14, 0
      %p90 = por %p88, %p89
      %p91 = scmp.ne.s32.totalorder %s83, %s85
      %p92 = scmp.eq.s32.totalorder %s19, 1
      %p93 = por %p91, %p92
      %p94 = scmp.ne.s32.totalorder %s85, %s86
      %p95 = scmp.eq.s32.totalorder %s19, 0
      %p96 = por %p94, %p95
      %p97 = scmp.ne.s32.totalorder %s85, %s86
      %p98 = scmp.eq.s32.totalorder %s20, 1
      %p99 = por %p97, %p98
      %p101 = scmp.ne.s32.totalorder %s86, %s100
      %p102 = scmp.eq.s32.totalorder %s20, 0
      %p103 = por %p101, %p102
      %s105 = sadd.s32 %s104, 1
      %p108 = scmp.eq.s32.totalorder %s14, 1
      %p109 = scmp.ne.s32.totalorder %s104, %s106
      %p110 = scmp.eq.s32.totalorder %s14, 0
      %p111 = por %p109, %p110
      %p112 = scmp.ne.s32.totalorder %s104, %s106
      %p113 = scmp.eq.s32.totalorder %s19, 1
      %p114 = por %p112, %p113
      %p115 = scmp.ne.s32.totalorder %s106, %s107
      %p116 = scmp.eq.s32.totalorder %s19, 0
      %p117 = por %p115, %p116
      %p118 = scmp.ne.s32.totalorder %s106, %s107
      %p119 = scmp.eq.s32.totalorder %s20, 1
      %p120 = por %p118, %p119
      %p122 = scmp.ne.s32.totalorder %s107, %s121
      %p123 = scmp.eq.s32.totalorder %s20, 0
      %p124 = por %p122, %p123
      %s126 = sadd.s32 %s125, 1
      %p129 = scmp.eq.s32.totalorder %s14, 1
      %p130 = scmp.ne.s32.totalorder %s125, %s127
      %p131 = scmp.eq.s32.totalorder %s14, 0
      %p132 = por %p130, %p131
      %p133 = scmp.ne.s32.totalorder %s125, %s127
      %p134 = scmp.eq.s32.totalorder %s19, 1
      %p135 = por %p133, %p134
      %p136 = scmp.ne.s32.totalorder %s127, %s128
      %p137 = scmp.eq.s32.totalorder %s19, 0
      %p138 = por %p136, %p137
      %p139 = scmp.ne.s32.totalorder %s127, %s128
      %p140 = scmp.eq.s32.totalorder %s20, 1
      %p141 = por %p139, %p140
      %p143 = scmp.ne.s32.totalorder %s128, %s142
      %p144 = scmp.eq.s32.totalorder %s20, 0
      %p145 = por %p143, %p144
      %s146 = ssub.s32 %s21, %s33
      %p147 = scmp.eq.s32.totalorder %s146, 0
      %s149 = sadd.s32 %s148, 1
      %s150 = scalar_select %p147, %s148, %s149
      %p153 = pneg %p147
      %p154 = scmp.eq.s32.totalorder %s14, 1
      %p155 = por %p153, %p154
      %p156 = scmp.ne.s32.totalorder %s148, %s151
      %p157 = scmp.eq.s32.totalorder %s14, 0
      %p158 = por %p156, %p157
      %p159 = scmp.ne.s32.totalorder %s148, %s151
      %p160 = scmp.eq.s32.totalorder %s19, 1
      %p161 = por %p159, %p160
      %p162 = scmp.ne.s32.totalorder %s151, %s152
      %p163 = scmp.eq.s32.totalorder %s19, 0
      %p164 = por %p162, %p163
      %p165 = scmp.ne.s32.totalorder %s151, %s152
      %p166 = scmp.eq.s32.totalorder %s20, 1
      %p167 = por %p165, %p166
      %p169 = scmp.ne.s32.totalorder %s152, %s168
      %p170 = scmp.eq.s32.totalorder %s20, 0
      %p171 = por %p169, %p170
      %p172 = scmp.le.s32.totalorder 1, %s14
      %p173 = scmp.lt.s32.totalorder %s14, 3
      %p174 = pnand %p172, %p173
      %p175 = pneg %p174
      // Predicated region
      $region9: #{classifier_forward.1} parent=5 // pred_check
        _
      $region10: #{classifier_forward.1} parent=5 // pred_check_branch
        %177 = sbr.rel (%p174) target = $region12
      $region11: #{classifier_forward.1} parent=5 // pred_region
        %s178 = ssub.s32 %s14, 1
        // Predicated region
        $region13: #{classifier_forward.1} parent=11 // pred_check
          %p179 = pneg %p75
        $region14: #{classifier_forward.1} parent=11 // pred_check_branch
          %181 = sbr.rel (%p179) target = $region16
        $region15: #{classifier_forward.1} parent=11 // pred_region
          _
        $region16: #{classifier_forward.1} parent=11 // pred_fallthru
          _
        // Predicated region
        $region17: #{classifier_forward.1} parent=11 // pred_check
          %p182 = pneg %p96
        $region18: #{classifier_forward.1} parent=11 // pred_check_branch
          %184 = sbr.rel (%p182) target = $region20
        $region19: #{classifier_forward.1} parent=11 // pred_region
          _
        $region20: #{classifier_forward.1} parent=11 // pred_fallthru
          _
        // Predicated region
        $region21: #{classifier_forward.1} parent=11 // pred_check
          %p185 = pneg %p117
        $region22: #{classifier_forward.1} parent=11 // pred_check_branch
          %187 = sbr.rel (%p185) target = $region24
        $region23: #{classifier_forward.1} parent=11 // pred_region
          _
        $region24: #{classifier_forward.1} parent=11 // pred_fallthru
          _
        // Predicated region
        $region25: #{classifier_forward.1} parent=11 // pred_check
          %p188 = pneg %p138
        $region26: #{classifier_forward.1} parent=11 // pred_check_branch
          %190 = sbr.rel (%p188) target = $region28
        $region27: #{classifier_forward.1} parent=11 // pred_region
          _
        $region28: #{classifier_forward.1} parent=11 // pred_fallthru
          _
      $region12: #{classifier_forward.1} parent=5 // pred_fallthru
        _
      %p191 = scmp.lt.s32.totalorder %s14, 2
      // Predicated region
      $region29: #{classifier_forward.1} parent=5 // pred_check
        %p192 = pneg %p191
      $region30: #{classifier_forward.1} parent=5 // pred_check_branch
        %194 = sbr.rel (%p192) target = $region32
      $region31: #{classifier_forward.1} parent=5 // pred_region
        // Predicated region
        $region33: #{classifier_forward.1} parent=31 // pred_check
          %p195 = pneg %p48
        $region34: #{classifier_forward.1} parent=31 // pred_check_branch
          %197 = sbr.rel (%p195) target = $region36
        $region35: #{classifier_forward.1} parent=31 // pred_region
          %s198 = smul.u32 2, %s22
          %p199 = scmp.lt.s32.totalorder %s21, 1
          %s200 = scalar_select %p199, %s21, 1
          %p201 = scmp.lt.s32.totalorder %s198, 1
          %s202 = scalar_select %p201, %s198, 1
          %s203 = smul.addr %s200, 2
          %s204 = sadd.s32 %s202, %s203
          %s205 = smul.addr %s204, 2
          %s206 = scalar_lea.vmem %s0, %s205
          %s207 = smul.u32 2, %s22
        $region36: #{classifier_forward.1} parent=31 // pred_fallthru
          _
      $region32: #{classifier_forward.1} parent=5 // pred_fallthru
        _
      %p208 = scmp.le.s32.totalorder 1, %s14
      %p209 = scmp.lt.s32.totalorder %s14, 3
      %p210 = pnand %p208, %p209
      %p211 = pneg %p210
      // Predicated region
      $region37: #{classifier_forward.1} parent=5 // pred_check
        _
      $region38: #{classifier_forward.1} parent=5 // pred_check_branch
        %213 = sbr.rel (%p210) target = $region40
      $region39: #{classifier_forward.1} parent=5 // pred_region
        %s214 = ssub.s32 %s14, 1
        %s215 = smul.u32 2, %s24
        %p216 = scmp.lt.s32.totalorder %s23, 1
        %s217 = scalar_select %p216, %s23, 1
        %p218 = scmp.lt.s32.totalorder %s215, 1
        %s219 = scalar_select %p218, %s215, 1
        %s220 = smul.addr %s217, 2
        %s221 = sadd.s32 %s219, %s220
        %s222 = smul.addr %s221, 2
        %s223 = scalar_lea.vmem %s0, %s222
        %p224 = pneg %p54
        %p225 = pneg %p51
        %p226 = pneg %p75
        %p227 = pneg %p72
        %p228 = pneg %p96
        %p229 = pneg %p93
        %p230 = pneg %p117
        %p231 = pneg %p114
        %p232 = pneg %p138
        %p233 = pneg %p135
        %p234 = pneg %p164
        %p235 = pneg %p161
        %s236 = sand.u32 %s151, 1
        %s237 = scalar_lea.sflag [#allocation4], %s236
        %s238 = sand.u32 %s151, 1
        %s239 = scalar_lea.vmem [#allocation3], %s238
        %s240 = smul.u32 2, %s24
        %p241 = scmp.lt.s32.totalorder %s23, 1
        %s242 = scalar_select %p241, %s23, 1
        %p243 = scmp.lt.s32.totalorder %s240, 1
        %s244 = scalar_select %p243, %s240, 1
        %s245 = smul.addr %s242, 2
        %s246 = sadd.s32 %s244, %s245
        %s247 = smul.addr %s246, 2
        %s248 = scalar_lea.vmem %s0, %s247
        %s249 = smul.u32 2, %s24
        %p250 = scmp.eq.s32.totalorder %s24, 0
        // Predicated region
        $region41: #{classifier_forward.1} parent=39 // pred_check
          %p251 = pneg %p250
        $region42: #{classifier_forward.1} parent=39 // pred_check_branch
          %253 = sbr.rel (%p251) target = $region44
        $region43: #{classifier_forward.1} parent=39 // pred_region
          %vm254 = vcmask 7168
          %255 = vst.msk [vmem:[#allocation2] sm:$0xff] %vm254, 0.0
          %256 = vst.msk [vmem:[#allocation2 + $0x8] sm:$0xff] %vm254, 0.0
          %257 = vst.msk [vmem:[#allocation2 + $0x10] sm:$0xff] %vm254, 0.0
          %258 = vst.msk [vmem:[#allocation2 + $0x18] sm:$0xff] %vm254, 0.0
          %259 = vst.msk [vmem:[#allocation2 + $0x20] sm:$0xff] %vm254, 0.0
          %260 = vst.msk [vmem:[#allocation2 + $0x28] sm:$0xff] %vm254, 0.0
          %261 = vst.msk [vmem:[#allocation2 + $0x30] sm:$0xff] %vm254, 0.0
          %262 = vst.msk [vmem:[#allocation2 + $0x38] sm:$0xff] %vm254, 0.0
          %263 = vst.msk [vmem:[#allocation2 + $0x40] sm:$0xff] %vm254, 0.0
          %264 = vst.msk [vmem:[#allocation2 + $0x48] sm:$0xff] %vm254, 0.0
          %265 = vst.msk [vmem:[#allocation2 + $0x50] sm:$0xff] %vm254, 0.0
          %266 = vst.msk [vmem:[#allocation2 + $0x58] sm:$0xff] %vm254, 0.0
          %267 = vst.msk [vmem:[#allocation2 + $0x60] sm:$0xff] %vm254, 0.0
          %268 = vst.msk [vmem:[#allocation2 + $0x68] sm:$0xff] %vm254, 0.0
          %269 = vst.msk [vmem:[#allocation2 + $0x70] sm:$0xff] %vm254, 0.0
          %270 = vst.msk [vmem:[#allocation2 + $0x78] sm:$0xff] %vm254, 0.0
        $region44: #{classifier_forward.1} parent=39 // pred_fallthru
          _
        %v271 = vld [vmem:[%s248] sm:$0xf]
        %v272 = vunpack.c.l.bf16 %v271
        %v273 = vld [vmem:[%s1] sm:$0xf]
        %v274 = vld [vmem:[%s1 + $0x4] sm:$0xf]
        %v275 = vld [vmem:[%s1 + $0x8] sm:$0xf]
        %v276 = vld [vmem:[%s1 + $0xc] sm:$0xf]
        %v277 = vld [vmem:[%s1 + $0x10] sm:$0xf]
        %v278 = vld [vmem:[%s1 + $0x14] sm:$0xf]
        %v279 = vld [vmem:[%s1 + $0x18] sm:$0xf]
        %v280 = vld [vmem:[%s1 + $0x1c] sm:$0xf]
        %v281 = vld [vmem:[%s1 + $0x20] sm:$0xf]
        %v282 = vld [vmem:[%s1 + $0x24] sm:$0xf]
        %v283 = vld [vmem:[%s1 + $0x28] sm:$0xf]
        %v284 = vld [vmem:[%s1 + $0x2c] sm:$0xf]
        %v285 = vld [vmem:[%s1 + $0x30] sm:$0xf]
        %v286 = vld [vmem:[%s1 + $0x34] sm:$0xf]
        %v287 = vld [vmem:[%s1 + $0x38] sm:$0xf]
        %v288 = vld [vmem:[%s1 + $0x3c] sm:$0xf]
        %v289 = vunpack.c.l.bf16 %v273
        %v290 = vunpack.c.l.bf16 %v274
        %v291 = vunpack.c.l.bf16 %v275
        %v292 = vunpack.c.l.bf16 %v276
        %v293 = vunpack.c.l.bf16 %v277
        %v294 = vunpack.c.l.bf16 %v278
        %v295 = vunpack.c.l.bf16 %v279
        %v296 = vunpack.c.l.bf16 %v280
        %v297 = vunpack.c.l.bf16 %v281
        %v298 = vunpack.c.l.bf16 %v282
        %v299 = vunpack.c.l.bf16 %v283
        %v300 = vunpack.c.l.bf16 %v284
        %v301 = vunpack.c.l.bf16 %v285
        %v302 = vunpack.c.l.bf16 %v286
        %v303 = vunpack.c.l.bf16 %v287
        %v304 = vunpack.c.l.bf16 %v288
        %306 = vset.pattern.permute.xlu0 0
        %307 = vperm.xlu0 %306, %v289
        %v308 = vpop.permute.xlu0 %307
        %311 = vset.pattern.permute.xlu0 0
        %312 = vperm.xlu0 %311, %v290
        %v313 = vpop.permute.xlu0 %312
        %316 = vset.pattern.permute.xlu0 0
        %317 = vperm.xlu0 %316, %v291
        %v318 = vpop.permute.xlu0 %317
        %321 = vset.pattern.permute.xlu0 0
        %322 = vperm.xlu0 %321, %v292
        %v323 = vpop.permute.xlu0 %322
        %326 = vset.pattern.permute.xlu0 0
        %327 = vperm.xlu0 %326, %v293
        %v328 = vpop.permute.xlu0 %327
        %331 = vset.pattern.permute.xlu0 0
        %332 = vperm.xlu0 %331, %v294
        %v333 = vpop.permute.xlu0 %332
        %336 = vset.pattern.permute.xlu0 0
        %337 = vperm.xlu0 %336, %v295
        %v338 = vpop.permute.xlu0 %337
        %341 = vset.pattern.permute.xlu0 0
        %342 = vperm.xlu0 %341, %v296
        %v343 = vpop.permute.xlu0 %342
        %346 = vset.pattern.permute.xlu0 0
        %347 = vperm.xlu0 %346, %v297
        %v348 = vpop.permute.xlu0 %347
        %351 = vset.pattern.permute.xlu0 0
        %352 = vperm.xlu0 %351, %v298
        %v353 = vpop.permute.xlu0 %352
        %356 = vset.pattern.permute.xlu0 0
        %357 = vperm.xlu0 %356, %v299
        %v358 = vpop.permute.xlu0 %357
        %361 = vset.pattern.permute.xlu0 0
        %362 = vperm.xlu0 %361, %v300
        %v363 = vpop.permute.xlu0 %362
        %366 = vset.pattern.permute.xlu0 0
        %367 = vperm.xlu0 %366, %v301
        %v368 = vpop.permute.xlu0 %367
        %371 = vset.pattern.permute.xlu0 0
        %372 = vperm.xlu0 %371, %v302
        %v373 = vpop.permute.xlu0 %372
        %376 = vset.pattern.permute.xlu0 0
        %377 = vperm.xlu0 %376, %v303
        %v378 = vpop.permute.xlu0 %377
        %381 = vset.pattern.permute.xlu0 0
        %382 = vperm.xlu0 %381, %v304
        %v383 = vpop.permute.xlu0 %382
        %v386 = vperm.slane %v272, 0
        %v387 = vperm.slane %v272, 4
        %v390 = vperm.slane %v386, 0
        %v391 = vperm.slane %v387, 0
        %v392 = vmul.f32 %v308, %v390
        %v393 = vmul.f32 %v308, %v391
        %v394 = vmul.f32 %v313, %v390
        %v395 = vmul.f32 %v313, %v391
        %v396 = vmul.f32 %v318, %v390
        %v397 = vmul.f32 %v318, %v391
        %v398 = vmul.f32 %v323, %v390
        %v399 = vmul.f32 %v323, %v391
        %v400 = vmul.f32 %v328, %v390
        %v401 = vmul.f32 %v328, %v391
        %v402 = vmul.f32 %v333, %v390
        %v403 = vmul.f32 %v333, %v391
        %v404 = vmul.f32 %v338, %v390
        %v405 = vmul.f32 %v338, %v391
        %v406 = vmul.f32 %v343, %v390
        %v407 = vmul.f32 %v343, %v391
        %v408 = vmul.f32 %v348, %v390
        %v409 = vmul.f32 %v348, %v391
        %v410 = vmul.f32 %v353, %v390
        %v411 = vmul.f32 %v353, %v391
        %v412 = vmul.f32 %v358, %v390
        %v413 = vmul.f32 %v358, %v391
        %v414 = vmul.f32 %v363, %v390
        %v415 = vmul.f32 %v363, %v391
        %v416 = vmul.f32 %v368, %v390
        %v417 = vmul.f32 %v368, %v391
        %v418 = vmul.f32 %v373, %v390
        %v419 = vmul.f32 %v373, %v391
        %v420 = vmul.f32 %v378, %v390
        %v421 = vmul.f32 %v378, %v391
        %v422 = vmul.f32 %v383, %v390
        %v423 = vmul.f32 %v383, %v391
        %v424 = vadd.f32 %v392, 0.0
        %v425 = vadd.f32 %v393, 0.0
        %v426 = vadd.f32 %v394, 0.0
        %v427 = vadd.f32 %v395, 0.0
        %v428 = vadd.f32 %v396, 0.0
        %v429 = vadd.f32 %v397, 0.0
        %v430 = vadd.f32 %v398, 0.0
        %v431 = vadd.f32 %v399, 0.0
        %v432 = vadd.f32 %v400, 0.0
        %v433 = vadd.f32 %v401, 0.0
        %v434 = vadd.f32 %v402, 0.0
        %v435 = vadd.f32 %v403, 0.0
        %v436 = vadd.f32 %v404, 0.0
        %v437 = vadd.f32 %v405, 0.0
        %v438 = vadd.f32 %v406, 0.0
        %v439 = vadd.f32 %v407, 0.0
        %v440 = vadd.f32 %v408, 0.0
        %v441 = vadd.f32 %v409, 0.0
        %v442 = vadd.f32 %v410, 0.0
        %v443 = vadd.f32 %v411, 0.0
        %v444 = vadd.f32 %v412, 0.0
        %v445 = vadd.f32 %v413, 0.0
        %v446 = vadd.f32 %v414, 0.0
        %v447 = vadd.f32 %v415, 0.0
        %v448 = vadd.f32 %v416, 0.0
        %v449 = vadd.f32 %v417, 0.0
        %v450 = vadd.f32 %v418, 0.0
        %v451 = vadd.f32 %v419, 0.0
        %v452 = vadd.f32 %v420, 0.0
        %v453 = vadd.f32 %v421, 0.0
        %v454 = vadd.f32 %v422, 0.0
        %v455 = vadd.f32 %v423, 0.0
        %456 = vset.pattern.permute.xlu0 1
        %457 = vperm.xlu0 %456, %v289
        %v458 = vpop.permute.xlu0 %457
        %460 = vset.pattern.permute.xlu0 1
        %461 = vperm.xlu0 %460, %v290
        %v462 = vpop.permute.xlu0 %461
        %464 = vset.pattern.permute.xlu0 1
        %465 = vperm.xlu0 %464, %v291
        %v466 = vpop.permute.xlu0 %465
        %468 = vset.pattern.permute.xlu0 1
        %469 = vperm.xlu0 %468, %v292
        %v470 = vpop.permute.xlu0 %469
        %472 = vset.pattern.permute.xlu0 1
        %473 = vperm.xlu0 %472, %v293
        %v474 = vpop.permute.xlu0 %473
        %476 = vset.pattern.permute.xlu0 1
        %477 = vperm.xlu0 %476, %v294
        %v478 = vpop.permute.xlu0 %477
        %480 = vset.pattern.permute.xlu0 1
        %481 = vperm.xlu0 %480, %v295
        %v482 = vpop.permute.xlu0 %481
        %484 = vset.pattern.permute.xlu0 1
        %485 = vperm.xlu0 %484, %v296
        %v486 = vpop.permute.xlu0 %485
        %488 = vset.pattern.permute.xlu0 1
        %489 = vperm.xlu0 %488, %v297
        %v490 = vpop.permute.xlu0 %489
        %492 = vset.pattern.permute.xlu0 1
        %493 = vperm.xlu0 %492, %v298
        %v494 = vpop.permute.xlu0 %493
        %496 = vset.pattern.permute.xlu0 1
        %497 = vperm.xlu0 %496, %v299
        %v498 = vpop.permute.xlu0 %497
        %500 = vset.pattern.permute.xlu0 1
        %501 = vperm.xlu0 %500, %v300
        %v502 = vpop.permute.xlu0 %501
        %504 = vset.pattern.permute.xlu0 1
        %505 = vperm.xlu0 %504, %v301
        %v506 = vpop.permute.xlu0 %505
        %508 = vset.pattern.permute.xlu0 1
        %509 = vperm.xlu0 %508, %v302
        %v510 = vpop.permute.xlu0 %509
        %512 = vset.pattern.permute.xlu0 1
        %513 = vperm.xlu0 %512, %v303
        %v514 = vpop.permute.xlu0 %513
        %516 = vset.pattern.permute.xlu0 1
        %517 = vperm.xlu0 %516, %v304
        %v518 = vpop.permute.xlu0 %517
        %v520 = vperm.slane %v272, 1
        %v521 = vperm.slane %v272, 5
        %v524 = vperm.slane %v520, 1
        %v525 = vperm.slane %v521, 1
        %v526 = vmul.f32 %v458, %v524
        %v527 = vmul.f32 %v458, %v525
        %v528 = vmul.f32 %v462, %v524
        %v529 = vmul.f32 %v462, %v525
        %v530 = vmul.f32 %v466, %v524
        %v531 = vmul.f32 %v466, %v525
        %v532 = vmul.f32 %v470, %v524
        %v533 = vmul.f32 %v470, %v525
        %v534 = vmul.f32 %v474, %v524
        %v535 = vmul.f32 %v474, %v525
        %v536 = vmul.f32 %v478, %v524
        %v537 = vmul.f32 %v478, %v525
        %v538 = vmul.f32 %v482, %v524
        %v539 = vmul.f32 %v482, %v525
        %v540 = vmul.f32 %v486, %v524
        %v541 = vmul.f32 %v486, %v525
        %v542 = vmul.f32 %v490, %v524
        %v543 = vmul.f32 %v490, %v525
        %v544 = vmul.f32 %v494, %v524
        %v545 = vmul.f32 %v494, %v525
        %v546 = vmul.f32 %v498, %v524
        %v547 = vmul.f32 %v498, %v525
        %v548 = vmul.f32 %v502, %v524
        %v549 = vmul.f32 %v502, %v525
        %v550 = vmul.f32 %v506, %v524
        %v551 = vmul.f32 %v506, %v525
        %v552 = vmul.f32 %v510, %v524
        %v553 = vmul.f32 %v510, %v525
        %v554 = vmul.f32 %v514, %v524
        %v555 = vmul.f32 %v514, %v525
        %v556 = vmul.f32 %v518, %v524
        %v557 = vmul.f32 %v518, %v525
        %v558 = vadd.f32 %v424, %v526
        %v559 = vadd.f32 %v425, %v527
        %v560 = vadd.f32 %v426, %v528
        %v561 = vadd.f32 %v427, %v529
        %v562 = vadd.f32 %v428, %v530
        %v563 = vadd.f32 %v429, %v531
        %v564 = vadd.f32 %v430, %v532
        %v565 = vadd.f32 %v431, %v533
        %v566 = vadd.f32 %v432, %v534
        %v567 = vadd.f32 %v433, %v535
        %v568 = vadd.f32 %v434, %v536
        %v569 = vadd.f32 %v435, %v537
        %v570 = vadd.f32 %v436, %v538
        %v571 = vadd.f32 %v437, %v539
        %v572 = vadd.f32 %v438, %v540
        %v573 = vadd.f32 %v439, %v541
        %v574 = vadd.f32 %v440, %v542
        %v575 = vadd.f32 %v441, %v543
        %v576 = vadd.f32 %v442, %v544
        %v577 = vadd.f32 %v443, %v545
        %v578 = vadd.f32 %v444, %v546
        %v579 = vadd.f32 %v445, %v547
        %v580 = vadd.f32 %v446, %v548
        %v581 = vadd.f32 %v447, %v549
        %v582 = vadd.f32 %v448, %v550
        %v583 = vadd.f32 %v449, %v551
        %v584 = vadd.f32 %v450, %v552
        %v585 = vadd.f32 %v451, %v553
        %v586 = vadd.f32 %v452, %v554
        %v587 = vadd.f32 %v453, %v555
        %v588 = vadd.f32 %v454, %v556
        %v589 = vadd.f32 %v455, %v557
        %590 = vset.pattern.permute.xlu0 2
        %591 = vperm.xlu0 %590, %v289
        %v592 = vpop.permute.xlu0 %591
        %594 = vset.pattern.permute.xlu0 2
        %595 = vperm.xlu0 %594, %v290
        %v596 = vpop.permute.xlu0 %595
        %598 = vset.pattern.permute.xlu0 2
        %599 = vperm.xlu0 %598, %v291
        %v600 = vpop.permute.xlu0 %599
        %602 = vset.pattern.permute.xlu0 2
        %603 = vperm.xlu0 %602, %v292
        %v604 = vpop.permute.xlu0 %603
        %606 = vset.pattern.permute.xlu0 2
        %607 = vperm.xlu0 %606, %v293
        %v608 = vpop.permute.xlu0 %607
        %610 = vset.pattern.permute.xlu0 2
        %611 = vperm.xlu0 %610, %v294
        %v612 = vpop.permute.xlu0 %611
        %614 = vset.pattern.permute.xlu0 2
        %615 = vperm.xlu0 %614, %v295
        %v616 = vpop.permute.xlu0 %615
        %618 = vset.pattern.permute.xlu0 2
        %619 = vperm.xlu0 %618, %v296
        %v620 = vpop.permute.xlu0 %619
        %622 = vset.pattern.permute.xlu0 2
        %623 = vperm.xlu0 %622, %v297
        %v624 = vpop.permute.xlu0 %623
        %626 = vset.pattern.permute.xlu0 2
        %627 = vperm.xlu0 %626, %v298
        %v628 = vpop.permute.xlu0 %627
        %630 = vset.pattern.permute.xlu0 2
        %631 = vperm.xlu0 %630, %v299
        %v632 = vpop.permute.xlu0 %631
        %634 = vset.pattern.permute.xlu0 2
        %635 = vperm.xlu0 %634, %v300
        %v636 = vpop.permute.xlu0 %635
        %638 = vset.pattern.permute.xlu0 2
        %639 = vperm.xlu0 %638, %v301
        %v640 = vpop.permute.xlu0 %639
        %642 = vset.pattern.permute.xlu0 2
        %643 = vperm.xlu0 %642, %v302
        %v644 = vpop.permute.xlu0 %643
        %646 = vset.pattern.permute.xlu0 2
        %647 = vperm.xlu0 %646, %v303
        %v648 = vpop.permute.xlu0 %647
        %650 = vset.pattern.permute.xlu0 2
        %651 = vperm.xlu0 %650, %v304
        %v652 = vpop.permute.xlu0 %651
        %v654 = vperm.slane %v272, 2
        %v655 = vperm.slane %v272, 6
        %v658 = vperm.slane %v654, 2
        %v659 = vperm.slane %v655, 2
        %v660 = vmul.f32 %v592, %v658
        %v661 = vmul.f32 %v592, %v659
        %v662 = vmul.f32 %v596, %v658
        %v663 = vmul.f32 %v596, %v659
        %v664 = vmul.f32 %v600, %v658
        %v665 = vmul.f32 %v600, %v659
        %v666 = vmul.f32 %v604, %v658
        %v667 = vmul.f32 %v604, %v659
        %v668 = vmul.f32 %v608, %v658
        %v669 = vmul.f32 %v608, %v659
        %v670 = vmul.f32 %v612, %v658
        %v671 = vmul.f32 %v612, %v659
        %v672 = vmul.f32 %v616, %v658
        %v673 = vmul.f32 %v616, %v659
        %v674 = vmul.f32 %v620, %v658
        %v675 = vmul.f32 %v620, %v659
        %v676 = vmul.f32 %v624, %v658
        %v677 = vmul.f32 %v624, %v659
        %v678 = vmul.f32 %v628, %v658
        %v679 = vmul.f32 %v628, %v659
        %v680 = vmul.f32 %v632, %v658
        %v681 = vmul.f32 %v632, %v659
        %v682 = vmul.f32 %v636, %v658
        %v683 = vmul.f32 %v636, %v659
        %v684 = vmul.f32 %v640, %v658
        %v685 = vmul.f32 %v640, %v659
        %v686 = vmul.f32 %v644, %v658
        %v687 = vmul.f32 %v644, %v659
        %v688 = vmul.f32 %v648, %v658
        %v689 = vmul.f32 %v648, %v659
        %v690 = vmul.f32 %v652, %v658
        %v691 = vmul.f32 %v652, %v659
        %v692 = vadd.f32 %v558, %v660
        %v693 = vadd.f32 %v559, %v661
        %v694 = vadd.f32 %v560, %v662
        %v695 = vadd.f32 %v561, %v663
        %v696 = vadd.f32 %v562, %v664
        %v697 = vadd.f32 %v563, %v665
        %v698 = vadd.f32 %v564, %v666
        %v699 = vadd.f32 %v565, %v667
        %v700 = vadd.f32 %v566, %v668
        %v701 = vadd.f32 %v567, %v669
        %v702 = vadd.f32 %v568, %v670
        %v703 = vadd.f32 %v569, %v671
        %v704 = vadd.f32 %v570, %v672
        %v705 = vadd.f32 %v571, %v673
        %v706 = vadd.f32 %v572, %v674
        %v707 = vadd.f32 %v573, %v675
        %v708 = vadd.f32 %v574, %v676
        %v709 = vadd.f32 %v575, %v677
        %v710 = vadd.f32 %v576, %v678
        %v711 = vadd.f32 %v577, %v679
        %v712 = vadd.f32 %v578, %v680
        %v713 = vadd.f32 %v579, %v681
        %v714 = vadd.f32 %v580, %v682
        %v715 = vadd.f32 %v581, %v683
        %v716 = vadd.f32 %v582, %v684
        %v717 = vadd.f32 %v583, %v685
        %v718 = vadd.f32 %v584, %v686
        %v719 = vadd.f32 %v585, %v687
        %v720 = vadd.f32 %v586, %v688
        %v721 = vadd.f32 %v587, %v689
        %v722 = vadd.f32 %v588, %v690
        %v723 = vadd.f32 %v589, %v691
        %724 = vset.pattern.permute.xlu0 3
        %725 = vperm.xlu0 %724, %v289
        %v726 = vpop.permute.xlu0 %725
        %728 = vset.pattern.permute.xlu0 3
        %729 = vperm.xlu0 %728, %v290
        %v730 = vpop.permute.xlu0 %729
        %732 = vset.pattern.permute.xlu0 3
        %733 = vperm.xlu0 %732, %v291
        %v734 = vpop.permute.xlu0 %733
        %736 = vset.pattern.permute.xlu0 3
        %737 = vperm.xlu0 %736, %v292
        %v738 = vpop.permute.xlu0 %737
        %740 = vset.pattern.permute.xlu0 3
        %741 = vperm.xlu0 %740, %v293
        %v742 = vpop.permute.xlu0 %741
        %744 = vset.pattern.permute.xlu0 3
        %745 = vperm.xlu0 %744, %v294
        %v746 = vpop.permute.xlu0 %745
        %748 = vset.pattern.permute.xlu0 3
        %749 = vperm.xlu0 %748, %v295
        %v750 = vpop.permute.xlu0 %749
        %752 = vset.pattern.permute.xlu0 3
        %753 = vperm.xlu0 %752, %v296
        %v754 = vpop.permute.xlu0 %753
        %756 = vset.pattern.permute.xlu0 3
        %757 = vperm.xlu0 %756, %v297
        %v758 = vpop.permute.xlu0 %757
        %760 = vset.pattern.permute.xlu0 3
        %761 = vperm.xlu0 %760, %v298
        %v762 = vpop.permute.xlu0 %761
        %764 = vset.pattern.permute.xlu0 3
        %765 = vperm.xlu0 %764, %v299
        %v766 = vpop.permute.xlu0 %765
        %768 = vset.pattern.permute.xlu0 3
        %769 = vperm.xlu0 %768, %v300
        %v770 = vpop.permute.xlu0 %769
        %772 = vset.pattern.permute.xlu0 3
        %773 = vperm.xlu0 %772, %v301
        %v774 = vpop.permute.xlu0 %773
        %776 = vset.pattern.permute.xlu0 3
        %777 = vperm.xlu0 %776, %v302
        %v778 = vpop.permute.xlu0 %777
        %780 = vset.pattern.permute.xlu0 3
        %781 = vperm.xlu0 %780, %v303
        %v782 = vpop.permute.xlu0 %781
        %784 = vset.pattern.permute.xlu0 3
        %785 = vperm.xlu0 %784, %v304
        %v786 = vpop.permute.xlu0 %785
        %v788 = vperm.slane %v272, 3
        %v789 = vperm.slane %v272, 7
        %v792 = vperm.slane %v788, 3
        %v793 = vperm.slane %v789, 3
        %v794 = vmul.f32 %v726, %v792
        %v795 = vmul.f32 %v726, %v793
        %v796 = vmul.f32 %v730, %v792
        %v797 = vmul.f32 %v730, %v793
        %v798 = vmul.f32 %v734, %v792
        %v799 = vmul.f32 %v734, %v793
        %v800 = vmul.f32 %v738, %v792
        %v801 = vmul.f32 %v738, %v793
        %v802 = vmul.f32 %v742, %v792
        %v803 = vmul.f32 %v742, %v793
        %v804 = vmul.f32 %v746, %v792
        %v805 = vmul.f32 %v746, %v793
        %v806 = vmul.f32 %v750, %v792
        %v807 = vmul.f32 %v750, %v793
        %v808 = vmul.f32 %v754, %v792
        %v809 = vmul.f32 %v754, %v793
        %v810 = vmul.f32 %v758, %v792
        %v811 = vmul.f32 %v758, %v793
        %v812 = vmul.f32 %v762, %v792
        %v813 = vmul.f32 %v762, %v793
        %v814 = vmul.f32 %v766, %v792
        %v815 = vmul.f32 %v766, %v793
        %v816 = vmul.f32 %v770, %v792
        %v817 = vmul.f32 %v770, %v793
        %v818 = vmul.f32 %v774, %v792
        %v819 = vmul.f32 %v774, %v793
        %v820 = vmul.f32 %v778, %v792
        %v821 = vmul.f32 %v778, %v793
        %v822 = vmul.f32 %v782, %v792
        %v823 = vmul.f32 %v782, %v793
        %v824 = vmul.f32 %v786, %v792
        %v825 = vmul.f32 %v786, %v793
        %v826 = vadd.f32 %v692, %v794
        %v827 = vadd.f32 %v693, %v795
        %v828 = vadd.f32 %v694, %v796
        %v829 = vadd.f32 %v695, %v797
        %v830 = vadd.f32 %v696, %v798
        %v831 = vadd.f32 %v697, %v799
        %v832 = vadd.f32 %v698, %v800
        %v833 = vadd.f32 %v699, %v801
        %v834 = vadd.f32 %v700, %v802
        %v835 = vadd.f32 %v701, %v803
        %v836 = vadd.f32 %v702, %v804
        %v837 = vadd.f32 %v703, %v805
        %v838 = vadd.f32 %v704, %v806
        %v839 = vadd.f32 %v705, %v807
        %v840 = vadd.f32 %v706, %v808
        %v841 = vadd.f32 %v707, %v809
        %v842 = vadd.f32 %v708, %v810
        %v843 = vadd.f32 %v709, %v811
        %v844 = vadd.f32 %v710, %v812
        %v845 = vadd.f32 %v711, %v813
        %v846 = vadd.f32 %v712, %v814
        %v847 = vadd.f32 %v713, %v815
        %v848 = vadd.f32 %v714, %v816
        %v849 = vadd.f32 %v715, %v817
        %v850 = vadd.f32 %v716, %v818
        %v851 = vadd.f32 %v717, %v819
        %v852 = vadd.f32 %v718, %v820
        %v853 = vadd.f32 %v719, %v821
        %v854 = vadd.f32 %v720, %v822
        %v855 = vadd.f32 %v721, %v823
        %v856 = vadd.f32 %v722, %v824
        %v857 = vadd.f32 %v723, %v825
        %v858 = vld [vmem:[%s2] sm:$0xff]
        %v859 = vld [vmem:[%s2 + $0x8] sm:$0xff]
        %v860 = vld [vmem:[%s2 + $0x10] sm:$0xff]
        %v861 = vld [vmem:[%s2 + $0x18] sm:$0xff]
        %v862 = vld [vmem:[%s2 + $0x20] sm:$0xff]
        %v863 = vld [vmem:[%s2 + $0x28] sm:$0xff]
        %v864 = vld [vmem:[%s2 + $0x30] sm:$0xff]
        %v865 = vld [vmem:[%s2 + $0x38] sm:$0xff]
        %v866 = vld [vmem:[%s2 + $0x40] sm:$0xff]
        %v867 = vld [vmem:[%s2 + $0x48] sm:$0xff]
        %v868 = vld [vmem:[%s2 + $0x50] sm:$0xff]
        %v869 = vld [vmem:[%s2 + $0x58] sm:$0xff]
        %v870 = vld [vmem:[%s2 + $0x60] sm:$0xff]
        %v871 = vld [vmem:[%s2 + $0x68] sm:$0xff]
        %v872 = vld [vmem:[%s2 + $0x70] sm:$0xff]
        %v873 = vld [vmem:[%s2 + $0x78] sm:$0xff]
        %875 = vset.pattern.permute.xlu0 0
        %876 = vperm.xlu0 %875, %v858
        %v877 = vpop.permute.xlu0 %876
        %880 = vset.pattern.permute.xlu0 0
        %881 = vperm.xlu0 %880, %v859
        %v882 = vpop.permute.xlu0 %881
        %885 = vset.pattern.permute.xlu0 0
        %886 = vperm.xlu0 %885, %v860
        %v887 = vpop.permute.xlu0 %886
        %890 = vset.pattern.permute.xlu0 0
        %891 = vperm.xlu0 %890, %v861
        %v892 = vpop.permute.xlu0 %891
        %895 = vset.pattern.permute.xlu0 0
        %896 = vperm.xlu0 %895, %v862
        %v897 = vpop.permute.xlu0 %896
        %900 = vset.pattern.permute.xlu0 0
        %901 = vperm.xlu0 %900, %v863
        %v902 = vpop.permute.xlu0 %901
        %905 = vset.pattern.permute.xlu0 0
        %906 = vperm.xlu0 %905, %v864
        %v907 = vpop.permute.xlu0 %906
        %910 = vset.pattern.permute.xlu0 0
        %911 = vperm.xlu0 %910, %v865
        %v912 = vpop.permute.xlu0 %911
        %915 = vset.pattern.permute.xlu0 0
        %916 = vperm.xlu0 %915, %v866
        %v917 = vpop.permute.xlu0 %916
        %920 = vset.pattern.permute.xlu0 0
        %921 = vperm.xlu0 %920, %v867
        %v922 = vpop.permute.xlu0 %921
        %925 = vset.pattern.permute.xlu0 0
        %926 = vperm.xlu0 %925, %v868
        %v927 = vpop.permute.xlu0 %926
        %930 = vset.pattern.permute.xlu0 0
        %931 = vperm.xlu0 %930, %v869
        %v932 = vpop.permute.xlu0 %931
        %935 = vset.pattern.permute.xlu0 0
        %936 = vperm.xlu0 %935, %v870
        %v937 = vpop.permute.xlu0 %936
        %940 = vset.pattern.permute.xlu0 0
        %941 = vperm.xlu0 %940, %v871
        %v942 = vpop.permute.xlu0 %941
        %945 = vset.pattern.permute.xlu0 0
        %946 = vperm.xlu0 %945, %v872
        %v947 = vpop.permute.xlu0 %946
        %950 = vset.pattern.permute.xlu0 0
        %951 = vperm.xlu0 %950, %v873
        %v952 = vpop.permute.xlu0 %951
        %v954 = vadd.f32 %v826, %v877
        %v955 = vadd.f32 %v827, %v877
        %v956 = vadd.f32 %v828, %v882
        %v957 = vadd.f32 %v829, %v882
        %v958 = vadd.f32 %v830, %v887
        %v959 = vadd.f32 %v831, %v887
        %v960 = vadd.f32 %v832, %v892
        %v961 = vadd.f32 %v833, %v892
        %v962 = vadd.f32 %v834, %v897
        %v963 = vadd.f32 %v835, %v897
        %v964 = vadd.f32 %v836, %v902
        %v965 = vadd.f32 %v837, %v902
        %v966 = vadd.f32 %v838, %v907
        %v967 = vadd.f32 %v839, %v907
        %v968 = vadd.f32 %v840, %v912
        %v969 = vadd.f32 %v841, %v912
        %v970 = vadd.f32 %v842, %v917
        %v971 = vadd.f32 %v843, %v917
        %v972 = vadd.f32 %v844, %v922
        %v973 = vadd.f32 %v845, %v922
        %v974 = vadd.f32 %v846, %v927
        %v975 = vadd.f32 %v847, %v927
        %v976 = vadd.f32 %v848, %v932
        %v977 = vadd.f32 %v849, %v932
        %v978 = vadd.f32 %v850, %v937
        %v979 = vadd.f32 %v851, %v937
        %v980 = vadd.f32 %v852, %v942
        %v981 = vadd.f32 %v853, %v942
        %v982 = vadd.f32 %v854, %v947
        %v983 = vadd.f32 %v855, %v947
        %v984 = vadd.f32 %v856, %v952
        %v985 = vadd.f32 %v857, %v952
        %v986 = vmax.f32 %v954, 0.0
        %v987 = vmax.f32 %v955, 0.0
        %v988 = vmax.f32 %v956, 0.0
        %v989 = vmax.f32 %v957, 0.0
        %v990 = vmax.f32 %v958, 0.0
        %v991 = vmax.f32 %v959, 0.0
        %v992 = vmax.f32 %v960, 0.0
        %v993 = vmax.f32 %v961, 0.0
        %v994 = vmax.f32 %v962, 0.0
        %v995 = vmax.f32 %v963, 0.0
        %v996 = vmax.f32 %v964, 0.0
        %v997 = vmax.f32 %v965, 0.0
        %v998 = vmax.f32 %v966, 0.0
        %v999 = vmax.f32 %v967, 0.0
        %v1000 = vmax.f32 %v968, 0.0
        %v1001 = vmax.f32 %v969, 0.0
        %v1002 = vmax.f32 %v970, 0.0
        %v1003 = vmax.f32 %v971, 0.0
        %v1004 = vmax.f32 %v972, 0.0
        %v1005 = vmax.f32 %v973, 0.0
        %v1006 = vmax.f32 %v974, 0.0
        %v1007 = vmax.f32 %v975, 0.0
        %v1008 = vmax.f32 %v976, 0.0
        %v1009 = vmax.f32 %v977, 0.0
        %v1010 = vmax.f32 %v978, 0.0
        %v1011 = vmax.f32 %v979, 0.0
        %v1012 = vmax.f32 %v980, 0.0
        %v1013 = vmax.f32 %v981, 0.0
        %v1014 = vmax.f32 %v982, 0.0
        %v1015 = vmax.f32 %v983, 0.0
        %v1016 = vmax.f32 %v984, 0.0
        %v1017 = vmax.f32 %v985, 0.0
        %v1018 = vld [vmem:[#allocation2] sm:$0xff]
        %v1019 = vld [vmem:[#allocation2 + $0x8] sm:$0xff]
        %v1020 = vld [vmem:[#allocation2 + $0x10] sm:$0xff]
        %v1021 = vld [vmem:[#allocation2 + $0x18] sm:$0xff]
        %v1022 = vld [vmem:[#allocation2 + $0x20] sm:$0xff]
        %v1023 = vld [vmem:[#allocation2 + $0x28] sm:$0xff]
        %v1024 = vld [vmem:[#allocation2 + $0x30] sm:$0xff]
        %v1025 = vld [vmem:[#allocation2 + $0x38] sm:$0xff]
        %v1026 = vld [vmem:[#allocation2 + $0x40] sm:$0xff]
        %v1027 = vld [vmem:[#allocation2 + $0x48] sm:$0xff]
        %v1028 = vld [vmem:[#allocation2 + $0x50] sm:$0xff]
        %v1029 = vld [vmem:[#allocation2 + $0x58] sm:$0xff]
        %v1030 = vld [vmem:[#allocation2 + $0x60] sm:$0xff]
        %v1031 = vld [vmem:[#allocation2 + $0x68] sm:$0xff]
        %v1032 = vld [vmem:[#allocation2 + $0x70] sm:$0xff]
        %v1033 = vld [vmem:[#allocation2 + $0x78] sm:$0xff]
        %v1034 = vadd.f32 %v986, %v987
        %1035 = vadd.xlane.f32.xlu0 %v1034
        %v1036 = vpop.xlane.xlu0 %1035
        %v1037 = vadd.f32 %v988, %v989
        %1038 = vadd.xlane.f32.xlu0 %v1037
        %v1039 = vpop.xlane.xlu0 %1038
        %v1040 = vadd.f32 %v990, %v991
        %1041 = vadd.xlane.f32.xlu0 %v1040
        %v1042 = vpop.xlane.xlu0 %1041
        %v1043 = vadd.f32 %v992, %v993
        %1044 = vadd.xlane.f32.xlu0 %v1043
        %v1045 = vpop.xlane.xlu0 %1044
        %v1046 = vadd.f32 %v994, %v995
        %1047 = vadd.xlane.f32.xlu0 %v1046
        %v1048 = vpop.xlane.xlu0 %1047
        %v1049 = vadd.f32 %v996, %v997
        %1050 = vadd.xlane.f32.xlu0 %v1049
        %v1051 = vpop.xlane.xlu0 %1050
        %v1052 = vadd.f32 %v998, %v999
        %1053 = vadd.xlane.f32.xlu0 %v1052
        %v1054 = vpop.xlane.xlu0 %1053
        %v1055 = vadd.f32 %v1000, %v1001
        %1056 = vadd.xlane.f32.xlu0 %v1055
        %v1057 = vpop.xlane.xlu0 %1056
        %v1058 = vadd.f32 %v1002, %v1003
        %1059 = vadd.xlane.f32.xlu0 %v1058
        %v1060 = vpop.xlane.xlu0 %1059
        %v1061 = vadd.f32 %v1004, %v1005
        %1062 = vadd.xlane.f32.xlu0 %v1061
        %v1063 = vpop.xlane.xlu0 %1062
        %v1064 = vadd.f32 %v1006, %v1007
        %1065 = vadd.xlane.f32.xlu0 %v1064
        %v1066 = vpop.xlane.xlu0 %1065
        %v1067 = vadd.f32 %v1008, %v1009
        %1068 = vadd.xlane.f32.xlu0 %v1067
        %v1069 = vpop.xlane.xlu0 %1068
        %v1070 = vadd.f32 %v1010, %v1011
        %1071 = vadd.xlane.f32.xlu0 %v1070
        %v1072 = vpop.xlane.xlu0 %1071
        %v1073 = vadd.f32 %v1012, %v1013
        %1074 = vadd.xlane.f32.xlu0 %v1073
        %v1075 = vpop.xlane.xlu0 %1074
        %v1076 = vadd.f32 %v1014, %v1015
        %1077 = vadd.xlane.f32.xlu0 %v1076
        %v1078 = vpop.xlane.xlu0 %1077
        %v1079 = vadd.f32 %v1016, %v1017
        %1080 = vadd.xlane.f32.xlu0 %v1079
        %v1081 = vpop.xlane.xlu0 %1080
        %v1082 = vadd.f32 %v1018, %v1036
        %v1083 = vadd.f32 %v1019, %v1039
        %v1084 = vadd.f32 %v1020, %v1042
        %v1085 = vadd.f32 %v1021, %v1045
        %v1086 = vadd.f32 %v1022, %v1048
        %v1087 = vadd.f32 %v1023, %v1051
        %v1088 = vadd.f32 %v1024, %v1054
        %v1089 = vadd.f32 %v1025, %v1057
        %v1090 = vadd.f32 %v1026, %v1060
        %v1091 = vadd.f32 %v1027, %v1063
        %v1092 = vadd.f32 %v1028, %v1066
        %v1093 = vadd.f32 %v1029, %v1069
        %v1094 = vadd.f32 %v1030, %v1072
        %v1095 = vadd.f32 %v1031, %v1075
        %v1096 = vadd.f32 %v1032, %v1078
        %v1097 = vadd.f32 %v1033, %v1081
        %vm1098 = vcmask 7168
        %1099 = vst.msk [vmem:[#allocation2] sm:$0xff] %vm1098, %v1082
        %1100 = vst.msk [vmem:[#allocation2 + $0x8] sm:$0xff] %vm1098, %v1083
        %1101 = vst.msk [vmem:[#allocation2 + $0x10] sm:$0xff] %vm1098, %v1084
        %1102 = vst.msk [vmem:[#allocation2 + $0x18] sm:$0xff] %vm1098, %v1085
        %1103 = vst.msk [vmem:[#allocation2 + $0x20] sm:$0xff] %vm1098, %v1086
        %1104 = vst.msk [vmem:[#allocation2 + $0x28] sm:$0xff] %vm1098, %v1087
        %1105 = vst.msk [vmem:[#allocation2 + $0x30] sm:$0xff] %vm1098, %v1088
        %1106 = vst.msk [vmem:[#allocation2 + $0x38] sm:$0xff] %vm1098, %v1089
        %1107 = vst.msk [vmem:[#allocation2 + $0x40] sm:$0xff] %vm1098, %v1090
        %1108 = vst.msk [vmem:[#allocation2 + $0x48] sm:$0xff] %vm1098, %v1091
        %1109 = vst.msk [vmem:[#allocation2 + $0x50] sm:$0xff] %vm1098, %v1092
        %1110 = vst.msk [vmem:[#allocation2 + $0x58] sm:$0xff] %vm1098, %v1093
        %1111 = vst.msk [vmem:[#allocation2 + $0x60] sm:$0xff] %vm1098, %v1094
        %1112 = vst.msk [vmem:[#allocation2 + $0x68] sm:$0xff] %vm1098, %v1095
        %1113 = vst.msk [vmem:[#allocation2 + $0x70] sm:$0xff] %vm1098, %v1096
        %1114 = vst.msk [vmem:[#allocation2 + $0x78] sm:$0xff] %vm1098, %v1097
        // Predicated region
        $region45: #{classifier_forward.1} parent=39 // pred_check
          %p1115 = pneg %p250
        $region46: #{classifier_forward.1} parent=39 // pred_check_branch
          %1117 = sbr.rel (%p1115) target = $region48
        $region47: #{classifier_forward.1} parent=39 // pred_region
          %v1118 = vld [vmem:[#allocation2] sm:$0xff]
          %v1119 = vld [vmem:[#allocation2 + $0x8] sm:$0xff]
          %v1120 = vld [vmem:[#allocation2 + $0x10] sm:$0xff]
          %v1121 = vld [vmem:[#allocation2 + $0x18] sm:$0xff]
          %v1122 = vld [vmem:[#allocation2 + $0x20] sm:$0xff]
          %v1123 = vld [vmem:[#allocation2 + $0x28] sm:$0xff]
          %v1124 = vld [vmem:[#allocation2 + $0x30] sm:$0xff]
          %v1125 = vld [vmem:[#allocation2 + $0x38] sm:$0xff]
          %v1126 = vld [vmem:[#allocation2 + $0x40] sm:$0xff]
          %v1127 = vld [vmem:[#allocation2 + $0x48] sm:$0xff]
          %v1128 = vld [vmem:[#allocation2 + $0x50] sm:$0xff]
          %v1129 = vld [vmem:[#allocation2 + $0x58] sm:$0xff]
          %v1130 = vld [vmem:[#allocation2 + $0x60] sm:$0xff]
          %v1131 = vld [vmem:[#allocation2 + $0x68] sm:$0xff]
          %v1132 = vld [vmem:[#allocation2 + $0x70] sm:$0xff]
          %v1133 = vld [vmem:[#allocation2 + $0x78] sm:$0xff]
          %v1134 = vmul.f32 %v1118, 0.00390625
          %v1135 = vmul.f32 %v1119, 0.00390625
          %v1136 = vmul.f32 %v1120, 0.00390625
          %v1137 = vmul.f32 %v1121, 0.00390625
          %v1138 = vmul.f32 %v1122, 0.00390625
          %v1139 = vmul.f32 %v1123, 0.00390625
          %v1140 = vmul.f32 %v1124, 0.00390625
          %v1141 = vmul.f32 %v1125, 0.00390625
          %v1142 = vmul.f32 %v1126, 0.00390625
          %v1143 = vmul.f32 %v1127, 0.00390625
          %v1144 = vmul.f32 %v1128, 0.00390625
          %v1145 = vmul.f32 %v1129, 0.00390625
          %v1146 = vmul.f32 %v1130, 0.00390625
          %v1147 = vmul.f32 %v1131, 0.00390625
          %v1148 = vmul.f32 %v1132, 0.00390625
          %v1149 = vmul.f32 %v1133, 0.00390625
          %v1150 = vpack.c.bf16 %v1134, %v1134
          %v1151 = vpack.c.bf16 %v1135, %v1135
          %v1152 = vpack.c.bf16 %v1136, %v1136
          %v1153 = vpack.c.bf16 %v1137, %v1137
          %v1154 = vpack.c.bf16 %v1138, %v1138
          %v1155 = vpack.c.bf16 %v1139, %v1139
          %v1156 = vpack.c.bf16 %v1140, %v1140
          %v1157 = vpack.c.bf16 %v1141, %v1141
          %v1158 = vpack.c.bf16 %v1142, %v1142
          %v1159 = vpack.c.bf16 %v1143, %v1143
          %v1160 = vpack.c.bf16 %v1144, %v1144
          %v1161 = vpack.c.bf16 %v1145, %v1145
          %v1162 = vpack.c.bf16 %v1146, %v1146
          %v1163 = vpack.c.bf16 %v1147, %v1147
          %v1164 = vpack.c.bf16 %v1148, %v1148
          %v1165 = vpack.c.bf16 %v1149, %v1149
          %v1166 = vunpack.c.l.bf16 %v1150
          %v1167 = vunpack.c.l.bf16 %v1151
          %v1168 = vunpack.c.l.bf16 %v1152
          %v1169 = vunpack.c.l.bf16 %v1153
          %v1170 = vunpack.c.l.bf16 %v1154
          %v1171 = vunpack.c.l.bf16 %v1155
          %v1172 = vunpack.c.l.bf16 %v1156
          %v1173 = vunpack.c.l.bf16 %v1157
          %v1174 = vunpack.c.l.bf16 %v1158
          %v1175 = vunpack.c.l.bf16 %v1159
          %v1176 = vunpack.c.l.bf16 %v1160
          %v1177 = vunpack.c.l.bf16 %v1161
          %v1178 = vunpack.c.l.bf16 %v1162
          %v1179 = vunpack.c.l.bf16 %v1163
          %v1180 = vunpack.c.l.bf16 %v1164
          %v1181 = vunpack.c.l.bf16 %v1165
          %v1182 = vld [vmem:[%s3] sm:$0xf]
          %v1183 = vld [vmem:[%s3 + $0x4] sm:$0xf]
          %v1184 = vld [vmem:[%s3 + $0x8] sm:$0xf]
          %v1185 = vld [vmem:[%s3 + $0xc] sm:$0xf]
          %v1186 = vld [vmem:[%s3 + $0x10] sm:$0xf]
          %v1187 = vld [vmem:[%s3 + $0x14] sm:$0xf]
          %v1188 = vld [vmem:[%s3 + $0x18] sm:$0xf]
          %v1189 = vld [vmem:[%s3 + $0x1c] sm:$0xf]
          %v1190 = vld [vmem:[%s3 + $0x20] sm:$0xf]
          %v1191 = vld [vmem:[%s3 + $0x24] sm:$0xf]
          %v1192 = vld [vmem:[%s3 + $0x28] sm:$0xf]
          %v1193 = vld [vmem:[%s3 + $0x2c] sm:$0xf]
          %v1194 = vld [vmem:[%s3 + $0x30] sm:$0xf]
          %v1195 = vld [vmem:[%s3 + $0x34] sm:$0xf]
          %v1196 = vld [vmem:[%s3 + $0x38] sm:$0xf]
          %v1197 = vld [vmem:[%s3 + $0x3c] sm:$0xf]
          %v1198 = vunpack.c.l.bf16 %v1182
          %v1199 = vunpack.c.l.bf16 %v1183
          %v1200 = vunpack.c.l.bf16 %v1184
          %v1201 = vunpack.c.l.bf16 %v1185
          %v1202 = vunpack.c.l.bf16 %v1186
          %v1203 = vunpack.c.l.bf16 %v1187
          %v1204 = vunpack.c.l.bf16 %v1188
          %v1205 = vunpack.c.l.bf16 %v1189
          %v1206 = vunpack.c.l.bf16 %v1190
          %v1207 = vunpack.c.l.bf16 %v1191
          %v1208 = vunpack.c.l.bf16 %v1192
          %v1209 = vunpack.c.l.bf16 %v1193
          %v1210 = vunpack.c.l.bf16 %v1194
          %v1211 = vunpack.c.l.bf16 %v1195
          %v1212 = vunpack.c.l.bf16 %v1196
          %v1213 = vunpack.c.l.bf16 %v1197
          %1215 = vset.pattern.permute.xlu0 0
          %1216 = vperm.xlu0 %1215, %v1166
          %v1217 = vpop.permute.xlu0 %1216
          %1220 = vset.pattern.permute.xlu0 0
          %1221 = vperm.xlu0 %1220, %v1167
          %v1222 = vpop.permute.xlu0 %1221
          %1225 = vset.pattern.permute.xlu0 0
          %1226 = vperm.xlu0 %1225, %v1168
          %v1227 = vpop.permute.xlu0 %1226
          %1230 = vset.pattern.permute.xlu0 0
          %1231 = vperm.xlu0 %1230, %v1169
          %v1232 = vpop.permute.xlu0 %1231
          %1235 = vset.pattern.permute.xlu0 0
          %1236 = vperm.xlu0 %1235, %v1170
          %v1237 = vpop.permute.xlu0 %1236
          %1240 = vset.pattern.permute.xlu0 0
          %1241 = vperm.xlu0 %1240, %v1171
          %v1242 = vpop.permute.xlu0 %1241
          %1245 = vset.pattern.permute.xlu0 0
          %1246 = vperm.xlu0 %1245, %v1172
          %v1247 = vpop.permute.xlu0 %1246
          %1250 = vset.pattern.permute.xlu0 0
          %1251 = vperm.xlu0 %1250, %v1173
          %v1252 = vpop.permute.xlu0 %1251
          %1255 = vset.pattern.permute.xlu0 0
          %1256 = vperm.xlu0 %1255, %v1174
          %v1257 = vpop.permute.xlu0 %1256
          %1260 = vset.pattern.permute.xlu0 0
          %1261 = vperm.xlu0 %1260, %v1175
          %v1262 = vpop.permute.xlu0 %1261
          %1265 = vset.pattern.permute.xlu0 0
          %1266 = vperm.xlu0 %1265, %v1176
          %v1267 = vpop.permute.xlu0 %1266
          %1270 = vset.pattern.permute.xlu0 0
          %1271 = vperm.xlu0 %1270, %v1177
          %v1272 = vpop.permute.xlu0 %1271
          %1275 = vset.pattern.permute.xlu0 0
          %1276 = vperm.xlu0 %1275, %v1178
          %v1277 = vpop.permute.xlu0 %1276
          %1280 = vset.pattern.permute.xlu0 0
          %1281 = vperm.xlu0 %1280, %v1179
          %v1282 = vpop.permute.xlu0 %1281
          %1285 = vset.pattern.permute.xlu0 0
          %1286 = vperm.xlu0 %1285, %v1180
          %v1287 = vpop.permute.xlu0 %1286
          %1290 = vset.pattern.permute.xlu0 0
          %1291 = vperm.xlu0 %1290, %v1181
          %v1292 = vpop.permute.xlu0 %1291
          %v1294 = vmul.f32 %v1217, %v1198
          %v1295 = vmul.f32 %v1222, %v1199
          %v1296 = vmul.f32 %v1227, %v1200
          %v1297 = vmul.f32 %v1232, %v1201
          %v1298 = vmul.f32 %v1237, %v1202
          %v1299 = vmul.f32 %v1242, %v1203
          %v1300 = vmul.f32 %v1247, %v1204
          %v1301 = vmul.f32 %v1252, %v1205
          %v1302 = vmul.f32 %v1257, %v1206
          %v1303 = vmul.f32 %v1262, %v1207
          %v1304 = vmul.f32 %v1267, %v1208
          %v1305 = vmul.f32 %v1272, %v1209
          %v1306 = vmul.f32 %v1277, %v1210
          %v1307 = vmul.f32 %v1282, %v1211
          %v1308 = vmul.f32 %v1287, %v1212
          %v1309 = vmul.f32 %v1292, %v1213
          %v1310 = vadd.f32 %v1294, %v1295
          %v1311 = vadd.f32 %v1310, %v1296
          %v1312 = vadd.f32 %v1311, %v1297
          %v1313 = vadd.f32 %v1312, %v1298
          %v1314 = vadd.f32 %v1313, %v1299
          %v1315 = vadd.f32 %v1314, %v1300
          %v1316 = vadd.f32 %v1315, %v1301
          %v1317 = vadd.f32 %v1316, %v1302
          %v1318 = vadd.f32 %v1317, %v1303
          %v1319 = vadd.f32 %v1318, %v1304
          %v1320 = vadd.f32 %v1319, %v1305
          %v1321 = vadd.f32 %v1320, %v1306
          %v1322 = vadd.f32 %v1321, %v1307
          %v1323 = vadd.f32 %v1322, %v1308
          %v1324 = vadd.f32 %v1323, %v1309
          %v1325 = vrot.slane %v1324, 4
          %v1326 = vadd.f32 %v1324, %v1325
          %v1327 = vrot.slane %v1326, 2
          %v1328 = vadd.f32 %v1326, %v1327
          %v1329 = vrot.slane %v1328, 1
          %v1330 = vadd.f32 %v1328, %v1329
          %v1331 = vld [vmem:[%s4] sm:$0x1]
          %v1332 = vadd.f32 %v1330, %v1331
          %1333 = vst [vmem:[%s239] sm:$0x1] %v1332
        $region48: #{classifier_forward.1} parent=39 // pred_fallthru
          _
        %s1334 = sand.u32 %s151, 1
        %s1335 = scalar_lea.sflag [#allocation4], %s1334
        %s1336 = sand.u32 %s151, 1
        %s1337 = scalar_lea.vmem [#allocation3], %s1336
        // Predicated region
        $region49: #{classifier_forward.1} parent=39 // pred_check
          %p1338 = pneg %p161
        $region50: #{classifier_forward.1} parent=39 // pred_check_branch
          %1340 = sbr.rel (%p1338) target = $region52
        $region51: #{classifier_forward.1} parent=39 // pred_region
          %1342 = vsyncadd %s1335, 0
          %s1343 = scalar_lea.hbm %s5, %s23
          %s1345 = sshll.u32 %s1337, 4
          %s1346 = int_to_ptr.vmem [resolvable:$true] %s1345
          %s1347 = sshll.u32 %s1343, 4
          %s1348 = int_to_ptr.hbm [resolvable:$true] %s1347
          %1350 = dma.vmem_to_hbm [thread:$0]  %s1346, 16, %s1348, %s1335
        $region52: #{classifier_forward.1} parent=39 // pred_fallthru
          _
      $region40: #{classifier_forward.1} parent=5 // pred_fallthru
        _
      %p1351 = scmp.le.s32.totalorder 2, %s14
      // Predicated region
      $region53: #{classifier_forward.1} parent=5 // pred_check
        %p1352 = pneg %p1351
      $region54: #{classifier_forward.1} parent=5 // pred_check_branch
        %1354 = sbr.rel (%p1352) target = $region56
      $region55: #{classifier_forward.1} parent=5 // pred_region
        %s1355 = ssub.s32 %s14, 2
        // Predicated region
        $region57: #{classifier_forward.1} parent=55 // pred_check
          %p1356 = pneg %p167
        $region58: #{classifier_forward.1} parent=55 // pred_check_branch
          %1358 = sbr.rel (%p1356) target = $region60
        $region59: #{classifier_forward.1} parent=55 // pred_region
          %s1359 = sand.u32 %s152, 1
          %s1360 = scalar_lea.sflag [#allocation4], %s1359
          %s1361 = sand.u32 %s152, 1
          %s1362 = scalar_lea.vmem [#allocation3], %s1361
          %1364 = dma.done %s1360, 16
        $region60: #{classifier_forward.1} parent=55 // pred_fallthru
          _
      $region56: #{classifier_forward.1} parent=5 // pred_fallthru
        _
    $region6: #{classifier_forward.1} parent=1 // loop_footer
      %s18 = sadd.s32 1, %s14
    $region7: #{classifier_forward.1} parent=1 // loop_footer_branch
      %13 = sbr.rel target = $region3
    $region8: #{classifier_forward.1} parent=1 // loop_exit
      _
    %1365 = vsyncpa [#allocation4], 1
    %s1366 = scalar_lea.sflag [#allocation4], 1
    %1367 = vsyncpa %s1366, 1

</llo_original>
